<compile_context>
chip_gen: v7x
topology: tpu7x:2x2x1
jax: 0.10.0
libtpu: 0.0.40
codegen_flags: <defaults>
</compile_context>

<pallas_src>
import functools
import math

import jax
import jax.numpy as jnp
from jax import lax
from jax.experimental import pallas as pl
from jax.experimental.pallas import tpu as pltpu


# -----------------------------------------------------------------------------
# Kernel: one full transformer layer for one (batch, query-block) grid step.
# -----------------------------------------------------------------------------
def _layer_kernel(xq_ref, xkv_ref, bias_ref,
                  ln1_g_ref, ln1_b_ref, wq_ref, wk_ref, wv_ref, wo_ref,
                  ln2_g_ref, ln2_b_ref, w1_ref, b1_ref, w2_ref, b2_ref,
                  o_ref):
    eps = 1e-5
    heads, dim, dim_head = wq_ref.shape
    scale = dim_head ** (-0.5)

    x_q = xq_ref[0]        # (blk_q, dim) f32 : query rows (also the residual)
    x_kv = xkv_ref[0]      # (n_kv, dim)  f32 : full sequence for keys/values

    def layer_norm(v, g_ref, b_ref):
        mu = jnp.mean(v, axis=-1, keepdims=True)
        var = jnp.mean(jnp.square(v - mu), axis=-1, keepdims=True)
        return (v - mu) * lax.rsqrt(var + eps) * g_ref[...] + b_ref[...]

    # ---------------- Attention ----------------
    xn_q = layer_norm(x_q, ln1_g_ref, ln1_b_ref).astype(jnp.bfloat16)
    xn_kv = layer_norm(x_kv, ln1_g_ref, ln1_b_ref).astype(jnp.bfloat16)

    blk_q = x_q.shape[0]
    n_kv = x_kv.shape[0]

    # Head-batched projections: contraction over `dim` (128-aligned at real
    # sizes); the head axis is a batch dim, never a lane-axis slice.
    xq3 = jnp.broadcast_to(xn_q[None], (heads, blk_q, dim))
    xkv3 = jnp.broadcast_to(xn_kv[None], (heads, n_kv, dim))
    q = jnp.einsum('hnd,hdk->hnk', xq3, wq_ref[...],
                   preferred_element_type=jnp.float32) * scale   # scale folded into q
    k = jnp.einsum('hnd,hdk->hnk', xkv3, wk_ref[...],
                   preferred_element_type=jnp.float32)
    v = jnp.einsum('hnd,hdk->hnk', xkv3, wv_ref[...],
                   preferred_element_type=jnp.float32)

    # Scores: batched over heads, contraction on last dims (no explicit k.T).
    dots = jnp.einsum('hqk,hmk->hqm', q.astype(jnp.bfloat16),
                      k.astype(jnp.bfloat16),
                      preferred_element_type=jnp.float32)        # (h, blk_q, n_kv)
    dots = dots + bias_ref[...]        # additive key-padding bias (finite -1e30)

    # Softmax in f32.
    m = jnp.max(dots, axis=-1, keepdims=True)
    e = jnp.exp(dots - m)
    s = jnp.sum(e, axis=-1, keepdims=True)
    # TODO(synk): pl.reciprocal(..., approx=True) (EUP vrcp) after validating
    # tolerance; exact path kept so the tight correctness check below holds.
    attn = e * pl.reciprocal(s, approx=False)

    ctx = jnp.einsum('hqm,hmk->hqk', attn.astype(jnp.bfloat16),
                     v.astype(jnp.bfloat16),
                     preferred_element_type=jnp.float32)         # (h, blk_q, dh)

    # Per-head output projection summed over heads == concat(heads) @ W_out,
    # but with no lane-axis concatenate / relayout.
    y = jnp.einsum('hqk,hkd->hqd', ctx.astype(jnp.bfloat16), wo_ref[...],
                   preferred_element_type=jnp.float32)           # (h, blk_q, dim)
    x1 = jnp.sum(y, axis=0) + x_q                                # residual

    # ---------------- FeedForward ----------------
    xn2 = layer_norm(x1, ln2_g_ref, ln2_b_ref)
    h = jnp.dot(xn2.astype(jnp.bfloat16), w1_ref[...],
                preferred_element_type=jnp.float32) + b1_ref[...]
    # exact GELU (PyTorch nn.GELU default), f32 on VPU/EUP
    h = 0.5 * h * (1.0 + lax.erf(h * (1.0 / math.sqrt(2.0))))
    f = jnp.dot(h.astype(jnp.bfloat16), w2_ref[...],
                preferred_element_type=jnp.float32) + b2_ref[...]

    o_ref[0] = (f + x1).astype(o_ref.dtype)                      # residual


# -----------------------------------------------------------------------------
# Wrapper-side weight preparation (head-major layout, bf16 matmul operands).
# -----------------------------------------------------------------------------
def prepare_layer_params(params, heads, dim_head):
    (ln1_g, ln1_b, wqkv, wout, ln2_g, ln2_b, w1, b1, w2, b2) = params
    dim = wqkv.shape[0]
    inner = heads * dim_head
    wq = wqkv[:, :inner]
    wk = wqkv[:, inner:2 * inner]
    wv = wqkv[:, 2 * inner:]

    def to_head_major(w):  # (dim, heads*dim_head) -> (heads, dim, dim_head)
        return jnp.transpose(w.reshape(dim, heads, dim_head), (1, 0, 2)).astype(jnp.bfloat16)

    wq_h, wk_h, wv_h = map(to_head_major, (wq, wk, wv))
    wo_h = wout.reshape(heads, dim_head, dim).astype(jnp.bfloat16)
    return (ln1_g, ln1_b, wq_h, wk_h, wv_h, wo_h, ln2_g, ln2_b,
            w1.astype(jnp.bfloat16), b1, w2.astype(jnp.bfloat16), b2)


# -----------------------------------------------------------------------------
# One layer via pallas_call (grid over batch x query-blocks).
# -----------------------------------------------------------------------------
def _layer_forward(x, mask_bias, prepared, *, blk_q):
    B, N, dim = x.shape
    assert N % blk_q == 0
    NQ = N // blk_q
    (ln1_g, ln1_b, wq_h, wk_h, wv_h, wo_h,
     ln2_g, ln2_b, w1, b1, w2, b2) = prepared

    def full_spec(arr):
        return pl.BlockSpec(arr.shape, lambda b, q: (0,) * arr.ndim)

    return pl.pallas_call(
        _layer_kernel,
        out_shape=jax.ShapeDtypeStruct((B, N, dim), jnp.float32),
        grid_spec=pltpu.PrefetchScalarGridSpec(
            num_scalar_prefetch=0,
            grid=(B, NQ),
            in_specs=[
                pl.BlockSpec((1, blk_q, dim), lambda b, q: (b, q, 0)),  # x (queries)
                pl.BlockSpec((1, N, dim), lambda b, q: (b, 0, 0)),      # x (keys/values)
                pl.BlockSpec((1, 1, N), lambda b, q: (b, 0, 0)),        # additive mask bias
                full_spec(ln1_g), full_spec(ln1_b),
                full_spec(wq_h), full_spec(wk_h), full_spec(wv_h), full_spec(wo_h),
                full_spec(ln2_g), full_spec(ln2_b),
                full_spec(w1), full_spec(b1), full_spec(w2), full_spec(b2),
            ],
            out_specs=pl.BlockSpec((1, blk_q, dim), lambda b, q: (b, q, 0)),
        ),
        compiler_params=pltpu.CompilerParams(
            dimension_semantics=("parallel", "parallel")),
    )(x, x, mask_bias, ln1_g, ln1_b, wq_h, wk_h, wv_h, wo_h,
      ln2_g, ln2_b, w1, b1, w2, b2)


def transformer_forward(x, layer_params, key_padding_mask=None, *, heads, dim_head):
    B, N, dim = x.shape
    blk_q = 128 if N % 128 == 0 else N
    if key_padding_mask is None:
        bias = jnp.zeros((B, N), jnp.float32)
    else:
        bias = jnp.where(key_padding_mask.astype(jnp.float32) > 0.5, -1e30, 0.0)
    bias = bias.astype(jnp.float32).reshape(B, 1, N)

    prepared_layers = [prepare_layer_params(p, heads, dim_head) for p in layer_params]
    for prepared in prepared_layers:
        x = _layer_forward(x, bias, prepared, blk_q=blk_q)
    return x


# -----------------------------------------------------------------------------
# Deterministic parameter init (canonical / PyTorch-like layout).
# -----------------------------------------------------------------------------
def init_params(key, *, dim, depth, heads, dim_head, mlp_dim):
    inner = heads * dim_head
    layers = []
    for _ in range(depth):
        key, *ks = jax.random.split(key, 11)
        ln1_g = 1.0 + 0.05 * jax.random.normal(ks[0], (1, dim), jnp.float32)
        ln1_b = 0.05 * jax.random.normal(ks[1], (1, dim), jnp.float32)
        wqkv = jax.random.normal(ks[2], (dim, 3 * inner), jnp.float32) * (dim ** -0.5)
        wout = jax.random.normal(ks[3], (inner, dim), jnp.float32) * (inner ** -0.5)
        ln2_g = 1.0 + 0.05 * jax.random.normal(ks[4], (1, dim), jnp.float32)
        ln2_b = 0.05 * jax.random.normal(ks[5], (1, dim), jnp.float32)
        w1 = jax.random.normal(ks[6], (dim, mlp_dim), jnp.float32) * (dim ** -0.5)
        b1 = 0.05 * jax.random.normal(ks[7], (1, mlp_dim), jnp.float32)
        w2 = jax.random.normal(ks[8], (mlp_dim, dim), jnp.float32) * (mlp_dim ** -0.5)
        b2 = 0.05 * jax.random.normal(ks[9], (1, dim), jnp.float32)
        layers.append((ln1_g, ln1_b, wqkv, wout, ln2_g, ln2_b, w1, b1, w2, b2))
    return layers


# -----------------------------------------------------------------------------
# Pure-JAX reference of the PyTorch module.  With bf16_matmul=True it applies
# the same bf16 casts at matmul boundaries as the kernel (tight check); with
# bf16_matmul=False it is full f32 (loose sanity check against bf16 rounding).
# -----------------------------------------------------------------------------
def reference_forward(x, layer_params, key_padding_mask=None, *,
                      heads, dim_head, bf16_matmul=False):
    eps = 1e-5
    inner = heads * dim_head
    scale = dim_head ** (-0.5)
    B, N, dim = x.shape

    bias = None
    if key_padding_mask is not None:
        bias = jnp.where(key_padding_mask > 0.5, -1e30, 0.0)[:, None, None, :]

    def mm(a):
        return a.astype(jnp.bfloat16) if bf16_matmul else a

    def ln(v, g, b):
        mu = jnp.mean(v, axis=-1, keepdims=True)
        var = jnp.mean(jnp.square(v - mu), axis=-1, keepdims=True)
        return (v - mu) * lax.rsqrt(var + eps) * g + b

    for (ln1_g, ln1_b, wqkv, wout, ln2_g, ln2_b, w1, b1, w2, b2) in layer_params:
        xn = ln(x, ln1_g, ln1_b)
        qkv = jnp.einsum('bnd,df->bnf', mm(xn), mm(wqkv),
                         preferred_element_type=jnp.float32)
        q, k, v = jnp.split(qkv, 3, axis=-1)
        rearr = lambda t: t.reshape(B, N, heads, dim_head).transpose(0, 2, 1, 3)
        q, k, v = map(rearr, (q, k, v))
        q = q * scale
        dots = jnp.einsum('bhnd,bhmd->bhnm', mm(q), mm(k),
                          preferred_element_type=jnp.float32)
        if bias is not None:
            dots = dots + bias
        attn = jax.nn.softmax(dots, axis=-1)
        ctx = jnp.einsum('bhnm,bhmd->bhnd', mm(attn), mm(v),
                         preferred_element_type=jnp.float32)
        ctx = ctx.transpose(0, 2, 1, 3).reshape(B, N, inner)
        out = jnp.einsum('bnf,fd->bnd', mm(ctx), mm(wout),
                         preferred_element_type=jnp.float32)
        x = out + x
        xn2 = ln(x, ln2_g, ln2_b)
        h = jnp.einsum('bnd,dm->bnm', mm(xn2), mm(w1),
                       preferred_element_type=jnp.float32) + b1
        h = 0.5 * h * (1.0 + lax.erf(h / math.sqrt(2.0)))
        x = jnp.einsum('bnm,md->bnd', mm(h), mm(w2),
                       preferred_element_type=jnp.float32) + b2 + x
    return x


if __name__ == "__main__":
    # Small shapes consistent with the module's forward.
    B, N = 2, 8
    dim, depth, heads, dim_head, mlp_dim = 32, 2, 4, 8, 64

    key = jax.random.PRNGKey(0)
    kx, kp = jax.random.split(key)
    x = jax.random.normal(kx, (B, N, dim), jnp.float32)
    params = init_params(kp, dim=dim, depth=depth, heads=heads,
                         dim_head=dim_head, mlp_dim=mlp_dim)

    # key_padding_mask: 1.0 = masked key.  Mask last two keys of batch elem 1.
    mask = jnp.zeros((B, N), jnp.float32).at[1, -2:].set(1.0)

    out = transformer_forward(x, params, key_padding_mask=mask,
                              heads=heads, dim_head=dim_head)
    out = jax.block_until_ready(out)
    assert out.shape == (B, N, dim)

    # Tight check vs a reference that mirrors the kernel's bf16-MXU numerics.
    ref_bf16 = reference_forward(x, params, key_padding_mask=mask,
                                 heads=heads, dim_head=dim_head, bf16_matmul=True)
    assert jnp.allclose(out, ref_bf16, atol=5e-3, rtol=5e-3), \
        "mismatch vs bf16-matched reference"

    # Loose sanity check vs pure-f32 math (difference is only bf16 rounding).
    ref_f32 = reference_forward(x, params, key_padding_mask=mask,
                                heads=heads, dim_head=dim_head, bf16_matmul=False)
    assert jnp.allclose(out, ref_f32, atol=1e-1, rtol=1e-1), \
        "mismatch vs f32 reference"

    print("KERNEL_OK")
</pallas_src>

<mosaic_0001>
module attributes {stable_mosaic.version = 11 : i64} {
  func.func @_layer_kernel(%arg0: i32, %arg1: i32, %arg2: memref<1x8x32xf32, #tpu.memory_space<vmem>>, %arg3: memref<1x8x32xf32, #tpu.memory_space<vmem>>, %arg4: memref<1x1x8xf32, #tpu.memory_space<vmem>>, %arg5: memref<1x32xf32, #tpu.memory_space<vmem>>, %arg6: memref<1x32xf32, #tpu.memory_space<vmem>>, %arg7: memref<4x32x8xbf16, #tpu.memory_space<vmem>>, %arg8: memref<4x32x8xbf16, #tpu.memory_space<vmem>>, %arg9: memref<4x32x8xbf16, #tpu.memory_space<vmem>>, %arg10: memref<4x8x32xbf16, #tpu.memory_space<vmem>>, %arg11: memref<1x32xf32, #tpu.memory_space<vmem>>, %arg12: memref<1x32xf32, #tpu.memory_space<vmem>>, %arg13: memref<32x64xbf16, #tpu.memory_space<vmem>>, %arg14: memref<1x64xf32, #tpu.memory_space<vmem>>, %arg15: memref<64x32xbf16, #tpu.memory_space<vmem>>, %arg16: memref<1x32xf32, #tpu.memory_space<vmem>>, %arg17: memref<1x8x32xf32, #tpu.memory_space<vmem>>) attributes {dimension_semantics = [#tpu.dimension_semantics<parallel>, #tpu.dimension_semantics<parallel>], iteration_bounds = array<i64: 2, 1>, scalar_prefetch = 0 : i64, scratch_operands = 0 : i64, tpu.core_type = #tpu.core_type<tc>, window_params = [{transform_indices = @transform_0, window_bounds = array<i64: 1, 8, 32>}, {transform_indices = @transform_1, window_bounds = array<i64: 1, 8, 32>}, {transform_indices = @transform_2, window_bounds = array<i64: 1, 1, 8>}, {pipeline_mode = #tpu.pipeline_mode<synchronous>, transform_indices = @transform_3, window_bounds = array<i64: 1, 32>}, {pipeline_mode = #tpu.pipeline_mode<synchronous>, transform_indices = @transform_4, window_bounds = array<i64: 1, 32>}, {pipeline_mode = #tpu.pipeline_mode<synchronous>, transform_indices = @transform_5, window_bounds = array<i64: 4, 32, 8>}, {pipeline_mode = #tpu.pipeline_mode<synchronous>, transform_indices = @transform_6, window_bounds = array<i64: 4, 32, 8>}, {pipeline_mode = #tpu.pipeline_mode<synchronous>, transform_indices = @transform_7, window_bounds = array<i64: 4, 32, 8>}, {pipeline_mode = #tpu.pipeline_mode<synchronous>, transform_indices = @transform_8, window_bounds = array<i64: 4, 8, 32>}, {pipeline_mode = #tpu.pipeline_mode<synchronous>, transform_indices = @transform_9, window_bounds = array<i64: 1, 32>}, {pipeline_mode = #tpu.pipeline_mode<synchronous>, transform_indices = @transform_10, window_bounds = array<i64: 1, 32>}, {pipeline_mode = #tpu.pipeline_mode<synchronous>, transform_indices = @transform_11, window_bounds = array<i64: 32, 64>}, {pipeline_mode = #tpu.pipeline_mode<synchronous>, transform_indices = @transform_12, window_bounds = array<i64: 1, 64>}, {pipeline_mode = #tpu.pipeline_mode<synchronous>, transform_indices = @transform_13, window_bounds = array<i64: 64, 32>}, {pipeline_mode = #tpu.pipeline_mode<synchronous>, transform_indices = @transform_14, window_bounds = array<i64: 1, 32>}, {transform_indices = @transform_15, window_bounds = array<i64: 1, 8, 32>}]} {
    %c0 = arith.constant 0 : index
    %c0_0 = arith.constant 0 : index
    %c0_1 = arith.constant 0 : index
    %0 = vector.load %arg2[%c0, %c0_0, %c0_1] : memref<1x8x32xf32, #tpu.memory_space<vmem>>, vector<1x8x32xf32>
    %1 = vector.shape_cast %0 : vector<1x8x32xf32> to vector<8x32xf32>
    %c0_2 = arith.constant 0 : index
    %c0_3 = arith.constant 0 : index
    %c0_4 = arith.constant 0 : index
    %2 = vector.load %arg3[%c0_2, %c0_3, %c0_4] : memref<1x8x32xf32, #tpu.memory_space<vmem>>, vector<1x8x32xf32>
    %3 = vector.shape_cast %2 : vector<1x8x32xf32> to vector<8x32xf32>
    %cst = arith.constant dense<0.000000e+00> : vector<8xf32>
    %4 = vector.multi_reduction <add>, %1, %cst [1] : vector<8x32xf32> to vector<8xf32>
    %5 = vector.shape_cast %4 : vector<8xf32> to vector<8x1xf32>
    %cst_5 = arith.constant 3.200000e+01 : f32
    %6 = vector.broadcast %cst_5 : f32 to vector<8x1xf32>
    %7 = arith.divf %5, %6 : vector<8x1xf32>
    %8 = vector.broadcast %7 : vector<8x1xf32> to vector<8x32xf32>
    %9 = arith.subf %1, %8 : vector<8x32xf32>
    %10 = arith.mulf %9, %9 : vector<8x32xf32>
    %cst_6 = arith.constant dense<0.000000e+00> : vector<8xf32>
    %11 = vector.multi_reduction <add>, %10, %cst_6 [1] : vector<8x32xf32> to vector<8xf32>
    %12 = vector.shape_cast %11 : vector<8xf32> to vector<8x1xf32>
    %cst_7 = arith.constant 3.200000e+01 : f32
    %13 = vector.broadcast %cst_7 : f32 to vector<8x1xf32>
    %14 = arith.divf %12, %13 : vector<8x1xf32>
    %15 = vector.broadcast %7 : vector<8x1xf32> to vector<8x32xf32>
    %16 = arith.subf %1, %15 : vector<8x32xf32>
    %cst_8 = arith.constant 9.99999974E-6 : f32
    %17 = vector.broadcast %cst_8 : f32 to vector<8x1xf32>
    %18 = arith.addf %14, %17 : vector<8x1xf32>
    %19 = math.rsqrt %18 : vector<8x1xf32>
    %20 = vector.broadcast %19 : vector<8x1xf32> to vector<8x32xf32>
    %21 = arith.mulf %16, %20 : vector<8x32xf32>
    %c0_9 = arith.constant 0 : index
    %c0_10 = arith.constant 0 : index
    %22 = vector.load %arg5[%c0_9, %c0_10] : memref<1x32xf32, #tpu.memory_space<vmem>>, vector<1x32xf32>
    %23 = vector.broadcast %22 : vector<1x32xf32> to vector<8x32xf32>
    %24 = arith.mulf %21, %23 : vector<8x32xf32>
    %c0_11 = arith.constant 0 : index
    %c0_12 = arith.constant 0 : index
    %25 = vector.load %arg6[%c0_11, %c0_12] : memref<1x32xf32, #tpu.memory_space<vmem>>, vector<1x32xf32>
    %26 = vector.broadcast %25 : vector<1x32xf32> to vector<8x32xf32>
    %27 = arith.addf %24, %26 : vector<8x32xf32>
    %28 = arith.truncf %27 : vector<8x32xf32> to vector<8x32xbf16>
    %cst_13 = arith.constant dense<0.000000e+00> : vector<8xf32>
    %29 = vector.multi_reduction <add>, %3, %cst_13 [1] : vector<8x32xf32> to vector<8xf32>
    %30 = vector.shape_cast %29 : vector<8xf32> to vector<8x1xf32>
    %cst_14 = arith.constant 3.200000e+01 : f32
    %31 = vector.broadcast %cst_14 : f32 to vector<8x1xf32>
    %32 = arith.divf %30, %31 : vector<8x1xf32>
    %33 = vector.broadcast %32 : vector<8x1xf32> to vector<8x32xf32>
    %34 = arith.subf %3, %33 : vector<8x32xf32>
    %35 = arith.mulf %34, %34 : vector<8x32xf32>
    %cst_15 = arith.constant dense<0.000000e+00> : vector<8xf32>
    %36 = vector.multi_reduction <add>, %35, %cst_15 [1] : vector<8x32xf32> to vector<8xf32>
    %37 = vector.shape_cast %36 : vector<8xf32> to vector<8x1xf32>
    %cst_16 = arith.constant 3.200000e+01 : f32
    %38 = vector.broadcast %cst_16 : f32 to vector<8x1xf32>
    %39 = arith.divf %37, %38 : vector<8x1xf32>
    %40 = vector.broadcast %32 : vector<8x1xf32> to vector<8x32xf32>
    %41 = arith.subf %3, %40 : vector<8x32xf32>
    %cst_17 = arith.constant 9.99999974E-6 : f32
    %42 = vector.broadcast %cst_17 : f32 to vector<8x1xf32>
    %43 = arith.addf %39, %42 : vector<8x1xf32>
    %44 = math.rsqrt %43 : vector<8x1xf32>
    %45 = vector.broadcast %44 : vector<8x1xf32> to vector<8x32xf32>
    %46 = arith.mulf %41, %45 : vector<8x32xf32>
    %c0_18 = arith.constant 0 : index
    %c0_19 = arith.constant 0 : index
    %47 = vector.load %arg5[%c0_18, %c0_19] : memref<1x32xf32, #tpu.memory_space<vmem>>, vector<1x32xf32>
    %48 = vector.broadcast %47 : vector<1x32xf32> to vector<8x32xf32>
    %49 = arith.mulf %46, %48 : vector<8x32xf32>
    %c0_20 = arith.constant 0 : index
    %c0_21 = arith.constant 0 : index
    %50 = vector.load %arg6[%c0_20, %c0_21] : memref<1x32xf32, #tpu.memory_space<vmem>>, vector<1x32xf32>
    %51 = vector.broadcast %50 : vector<1x32xf32> to vector<8x32xf32>
    %52 = arith.addf %49, %51 : vector<8x32xf32>
    %53 = arith.truncf %52 : vector<8x32xf32> to vector<8x32xbf16>
    %54 = vector.shape_cast %28 : vector<8x32xbf16> to vector<1x8x32xbf16>
    %55 = vector.shape_cast %54 : vector<1x8x32xbf16> to vector<1x8x32xbf16>
    %56 = vector.broadcast %55 : vector<1x8x32xbf16> to vector<4x8x32xbf16>
    %57 = vector.shape_cast %53 : vector<8x32xbf16> to vector<1x8x32xbf16>
    %58 = vector.shape_cast %57 : vector<1x8x32xbf16> to vector<1x8x32xbf16>
    %59 = vector.broadcast %58 : vector<1x8x32xbf16> to vector<4x8x32xbf16>
    %c0_22 = arith.constant 0 : index
    %c0_23 = arith.constant 0 : index
    %c0_24 = arith.constant 0 : index
    %60 = vector.load %arg7[%c0_22, %c0_23, %c0_24] : memref<4x32x8xbf16, #tpu.memory_space<vmem>>, vector<4x32x8xbf16>
    "tpu.trace_start"() <{level = 10 : i32, message = "hnd,hdk->hnk"}> : () -> ()
    %cst_25 = arith.constant dense<0.000000e+00> : vector<4x8x8xf32>
    %61 = tpu.matmul %56, %60, %cst_25 {dimension_numbers = #tpu.dot_dimension_numbers<[2], [1], [1], [2], [0, 0, 0, 1, 1, 2], [0], [0]>} : vector<4x8x32xbf16>, vector<4x32x8xbf16>, vector<4x8x8xf32> -> vector<4x8x8xf32>
    "tpu.trace_stop"() : () -> ()
    %cst_26 = arith.constant 0.353553385 : f32
    %62 = vector.broadcast %cst_26 : f32 to vector<4x8x8xf32>
    %63 = arith.mulf %61, %62 : vector<4x8x8xf32>
    %c0_27 = arith.constant 0 : index
    %c0_28 = arith.constant 0 : index
    %c0_29 = arith.constant 0 : index
    %64 = vector.load %arg8[%c0_27, %c0_28, %c0_29] : memref<4x32x8xbf16, #tpu.memory_space<vmem>>, vector<4x32x8xbf16>
    "tpu.trace_start"() <{level = 10 : i32, message = "hnd,hdk->hnk"}> : () -> ()
    %cst_30 = arith.constant dense<0.000000e+00> : vector<4x8x8xf32>
    %65 = tpu.matmul %59, %64, %cst_30 {dimension_numbers = #tpu.dot_dimension_numbers<[2], [1], [1], [2], [0, 0, 0, 1, 1, 2], [0], [0]>} : vector<4x8x32xbf16>, vector<4x32x8xbf16>, vector<4x8x8xf32> -> vector<4x8x8xf32>
    "tpu.trace_stop"() : () -> ()
    %c0_31 = arith.constant 0 : index
    %c0_32 = arith.constant 0 : index
    %c0_33 = arith.constant 0 : index
    %66 = vector.load %arg9[%c0_31, %c0_32, %c0_33] : memref<4x32x8xbf16, #tpu.memory_space<vmem>>, vector<4x32x8xbf16>
    "tpu.trace_start"() <{level = 10 : i32, message = "hnd,hdk->hnk"}> : () -> ()
    %cst_34 = arith.constant dense<0.000000e+00> : vector<4x8x8xf32>
    %67 = tpu.matmul %59, %66, %cst_34 {dimension_numbers = #tpu.dot_dimension_numbers<[2], [1], [1], [2], [0, 0, 0, 1, 1, 2], [0], [0]>} : vector<4x8x32xbf16>, vector<4x32x8xbf16>, vector<4x8x8xf32> -> vector<4x8x8xf32>
    "tpu.trace_stop"() : () -> ()
    %68 = arith.truncf %63 : vector<4x8x8xf32> to vector<4x8x8xbf16>
    %69 = arith.truncf %65 : vector<4x8x8xf32> to vector<4x8x8xbf16>
    "tpu.trace_start"() <{level = 10 : i32, message = "hqk,hmk->hqm"}> : () -> ()
    %cst_35 = arith.constant dense<0.000000e+00> : vector<4x8x8xf32>
    %70 = tpu.matmul %68, %69, %cst_35 {dimension_numbers = #tpu.dot_dimension_numbers<[2], [2], [1], [1], [0, 0, 0, 1, 1, 1], [0], [0]>} : vector<4x8x8xbf16>, vector<4x8x8xbf16>, vector<4x8x8xf32> -> vector<4x8x8xf32>
    "tpu.trace_stop"() : () -> ()
    %c0_36 = arith.constant 0 : index
    %c0_37 = arith.constant 0 : index
    %c0_38 = arith.constant 0 : index
    %71 = vector.load %arg4[%c0_36, %c0_37, %c0_38] : memref<1x1x8xf32, #tpu.memory_space<vmem>>, vector<1x1x8xf32>
    %72 = vector.broadcast %71 : vector<1x1x8xf32> to vector<4x8x8xf32>
    %73 = arith.addf %70, %72 : vector<4x8x8xf32>
    %cst_39 = arith.constant dense<0xFF800000> : vector<4x8xf32>
    %74 = vector.multi_reduction <maximumf>, %73, %cst_39 [2] : vector<4x8x8xf32> to vector<4x8xf32>
    %75 = vector.shape_cast %74 : vector<4x8xf32> to vector<4x8x1xf32>
    %76 = vector.broadcast %75 : vector<4x8x1xf32> to vector<4x8x8xf32>
    %77 = arith.subf %73, %76 : vector<4x8x8xf32>
    %78 = math.exp %77 : vector<4x8x8xf32>
    %cst_40 = arith.constant dense<0.000000e+00> : vector<4x8xf32>
    %79 = vector.multi_reduction <add>, %78, %cst_40 [2] : vector<4x8x8xf32> to vector<4x8xf32>
    %80 = vector.shape_cast %79 : vector<4x8xf32> to vector<4x8x1xf32>
    %81 = tpu.reciprocal %80 : vector<4x8x1xf32> -> vector<4x8x1xf32>
    %82 = vector.broadcast %81 : vector<4x8x1xf32> to vector<4x8x8xf32>
    %83 = arith.mulf %78, %82 : vector<4x8x8xf32>
    %84 = arith.truncf %83 : vector<4x8x8xf32> to vector<4x8x8xbf16>
    %85 = arith.truncf %67 : vector<4x8x8xf32> to vector<4x8x8xbf16>
    "tpu.trace_start"() <{level = 10 : i32, message = "hqm,hmk->hqk"}> : () -> ()
    %cst_41 = arith.constant dense<0.000000e+00> : vector<4x8x8xf32>
    %86 = tpu.matmul %84, %85, %cst_41 {dimension_numbers = #tpu.dot_dimension_numbers<[2], [1], [1], [2], [0, 0, 0, 1, 1, 2], [0], [0]>} : vector<4x8x8xbf16>, vector<4x8x8xbf16>, vector<4x8x8xf32> -> vector<4x8x8xf32>
    "tpu.trace_stop"() : () -> ()
    %87 = arith.truncf %86 : vector<4x8x8xf32> to vector<4x8x8xbf16>
    %c0_42 = arith.constant 0 : index
    %c0_43 = arith.constant 0 : index
    %c0_44 = arith.constant 0 : index
    %88 = vector.load %arg10[%c0_42, %c0_43, %c0_44] : memref<4x8x32xbf16, #tpu.memory_space<vmem>>, vector<4x8x32xbf16>
    "tpu.trace_start"() <{level = 10 : i32, message = "hqk,hkd->hqd"}> : () -> ()
    %cst_45 = arith.constant dense<0.000000e+00> : vector<4x8x32xf32>
    %89 = tpu.matmul %87, %88, %cst_45 {dimension_numbers = #tpu.dot_dimension_numbers<[2], [1], [1], [2], [0, 0, 0, 1, 1, 2], [0], [0]>} : vector<4x8x8xbf16>, vector<4x8x32xbf16>, vector<4x8x32xf32> -> vector<4x8x32xf32>
    "tpu.trace_stop"() : () -> ()
    %cst_46 = arith.constant dense<0.000000e+00> : vector<8x32xf32>
    %90 = vector.multi_reduction <add>, %89, %cst_46 [0] : vector<4x8x32xf32> to vector<8x32xf32>
    %91 = arith.addf %90, %1 : vector<8x32xf32>
    %cst_47 = arith.constant dense<0.000000e+00> : vector<8xf32>
    %92 = vector.multi_reduction <add>, %91, %cst_47 [1] : vector<8x32xf32> to vector<8xf32>
    %93 = vector.shape_cast %92 : vector<8xf32> to vector<8x1xf32>
    %cst_48 = arith.constant 3.200000e+01 : f32
    %94 = vector.broadcast %cst_48 : f32 to vector<8x1xf32>
    %95 = arith.divf %93, %94 : vector<8x1xf32>
    %96 = vector.broadcast %95 : vector<8x1xf32> to vector<8x32xf32>
    %97 = arith.subf %91, %96 : vector<8x32xf32>
    %98 = arith.mulf %97, %97 : vector<8x32xf32>
    %cst_49 = arith.constant dense<0.000000e+00> : vector<8xf32>
    %99 = vector.multi_reduction <add>, %98, %cst_49 [1] : vector<8x32xf32> to vector<8xf32>
    %100 = vector.shape_cast %99 : vector<8xf32> to vector<8x1xf32>
    %cst_50 = arith.constant 3.200000e+01 : f32
    %101 = vector.broadcast %cst_50 : f32 to vector<8x1xf32>
    %102 = arith.divf %100, %101 : vector<8x1xf32>
    %103 = vector.broadcast %95 : vector<8x1xf32> to vector<8x32xf32>
    %104 = arith.subf %91, %103 : vector<8x32xf32>
    %cst_51 = arith.constant 9.99999974E-6 : f32
    %105 = vector.broadcast %cst_51 : f32 to vector<8x1xf32>
    %106 = arith.addf %102, %105 : vector<8x1xf32>
    %107 = math.rsqrt %106 : vector<8x1xf32>
    %108 = vector.broadcast %107 : vector<8x1xf32> to vector<8x32xf32>
    %109 = arith.mulf %104, %108 : vector<8x32xf32>
    %c0_52 = arith.constant 0 : index
    %c0_53 = arith.constant 0 : index
    %110 = vector.load %arg11[%c0_52, %c0_53] : memref<1x32xf32, #tpu.memory_space<vmem>>, vector<1x32xf32>
    %111 = vector.broadcast %110 : vector<1x32xf32> to vector<8x32xf32>
    %112 = arith.mulf %109, %111 : vector<8x32xf32>
    %c0_54 = arith.constant 0 : index
    %c0_55 = arith.constant 0 : index
    %113 = vector.load %arg12[%c0_54, %c0_55] : memref<1x32xf32, #tpu.memory_space<vmem>>, vector<1x32xf32>
    %114 = vector.broadcast %113 : vector<1x32xf32> to vector<8x32xf32>
    %115 = arith.addf %112, %114 : vector<8x32xf32>
    %116 = arith.truncf %115 : vector<8x32xf32> to vector<8x32xbf16>
    %c0_56 = arith.constant 0 : index
    %c0_57 = arith.constant 0 : index
    %117 = vector.load %arg13[%c0_56, %c0_57] : memref<32x64xbf16, #tpu.memory_space<vmem>>, vector<32x64xbf16>
    %cst_58 = arith.constant dense<0.000000e+00> : vector<8x64xf32>
    %118 = tpu.matmul %116, %117, %cst_58 {dimension_numbers = #tpu.dot_dimension_numbers<[1], [0], [0], [1], [0, 0, 1, 1], [], []>} : vector<8x32xbf16>, vector<32x64xbf16>, vector<8x64xf32> -> vector<8x64xf32>
    %c0_59 = arith.constant 0 : index
    %c0_60 = arith.constant 0 : index
    %119 = vector.load %arg14[%c0_59, %c0_60] : memref<1x64xf32, #tpu.memory_space<vmem>>, vector<1x64xf32>
    %120 = vector.broadcast %119 : vector<1x64xf32> to vector<8x64xf32>
    %121 = arith.addf %118, %120 : vector<8x64xf32>
    %cst_61 = arith.constant 5.000000e-01 : f32
    %122 = vector.broadcast %cst_61 : f32 to vector<8x64xf32>
    %123 = arith.mulf %122, %121 : vector<8x64xf32>
    %cst_62 = arith.constant 0.707106769 : f32
    %124 = vector.broadcast %cst_62 : f32 to vector<8x64xf32>
    %125 = arith.mulf %121, %124 : vector<8x64xf32>
    %126 = math.erf %125 : vector<8x64xf32>
    %cst_63 = arith.constant 1.000000e+00 : f32
    %127 = vector.broadcast %cst_63 : f32 to vector<8x64xf32>
    %128 = arith.addf %127, %126 : vector<8x64xf32>
    %129 = arith.mulf %123, %128 : vector<8x64xf32>
    %130 = arith.truncf %129 : vector<8x64xf32> to vector<8x64xbf16>
    %c0_64 = arith.constant 0 : index
    %c0_65 = arith.constant 0 : index
    %131 = vector.load %arg15[%c0_64, %c0_65] : memref<64x32xbf16, #tpu.memory_space<vmem>>, vector<64x32xbf16>
    %cst_66 = arith.constant dense<0.000000e+00> : vector<8x32xf32>
    %132 = tpu.matmul %130, %131, %cst_66 {dimension_numbers = #tpu.dot_dimension_numbers<[1], [0], [0], [1], [0, 0, 1, 1], [], []>} : vector<8x64xbf16>, vector<64x32xbf16>, vector<8x32xf32> -> vector<8x32xf32>
    %c0_67 = arith.constant 0 : index
    %c0_68 = arith.constant 0 : index
    %133 = vector.load %arg16[%c0_67, %c0_68] : memref<1x32xf32, #tpu.memory_space<vmem>>, vector<1x32xf32>
    %134 = vector.broadcast %133 : vector<1x32xf32> to vector<8x32xf32>
    %135 = arith.addf %132, %134 : vector<8x32xf32>
    %136 = arith.addf %135, %91 : vector<8x32xf32>
    %c0_69 = arith.constant 0 : index
    %c0_70 = arith.constant 0 : index
    %c0_71 = arith.constant 0 : index
    %137 = vector.load %arg17[%c0_69, %c0_70, %c0_71] : memref<1x8x32xf32, #tpu.memory_space<vmem>>, vector<1x8x32xf32>
    %138 = vector.shape_cast %137 : vector<1x8x32xf32> to vector<8x32xf32>
    %139 = vector.shape_cast %136 : vector<8x32xf32> to vector<1x8x32xf32>
    tpu.vector_store %arg17[%c0_69, %c0_70, %c0_71], %139 {strides = array<i32>} : memref<1x8x32xf32, #tpu.memory_space<vmem>>, vector<1x8x32xf32>,
    return
  }
  func.func @transform_0(%arg0: i32, %arg1: i32) -> (i32, i32, i32) {
    %c0_i32 = arith.constant 0 : i32
    %c0_i32_0 = arith.constant 0 : i32
    return %arg0, %arg1, %c0_i32 : i32, i32, i32
  }
  func.func @transform_1(%arg0: i32, %arg1: i32) -> (i32, i32, i32) {
    %c0_i32 = arith.constant 0 : i32
    %c0_i32_0 = arith.constant 0 : i32
    %c0_i32_1 = arith.constant 0 : i32
    return %arg0, %c0_i32, %c0_i32_0 : i32, i32, i32
  }
  func.func @transform_2(%arg0: i32, %arg1: i32) -> (i32, i32, i32) {
    %c0_i32 = arith.constant 0 : i32
    %c0_i32_0 = arith.constant 0 : i32
    %c0_i32_1 = arith.constant 0 : i32
    return %arg0, %c0_i32, %c0_i32_0 : i32, i32, i32
  }
  func.func @transform_3(%arg0: i32, %arg1: i32) -> (i32, i32) {
    %c0_i32 = arith.constant 0 : i32
    %c0_i32_0 = arith.constant 0 : i32
    %c0_i32_1 = arith.constant 0 : i32
    return %c0_i32, %c0_i32_0 : i32, i32
  }
  func.func @transform_4(%arg0: i32, %arg1: i32) -> (i32, i32) {
    %c0_i32 = arith.constant 0 : i32
    %c0_i32_0 = arith.constant 0 : i32
    %c0_i32_1 = arith.constant 0 : i32
    return %c0_i32, %c0_i32_0 : i32, i32
  }
  func.func @transform_5(%arg0: i32, %arg1: i32) -> (i32, i32, i32) {
    %c0_i32 = arith.constant 0 : i32
    %c0_i32_0 = arith.constant 0 : i32
    %c0_i32_1 = arith.constant 0 : i32
    %c0_i32_2 = arith.constant 0 : i32
    return %c0_i32, %c0_i32_0, %c0_i32_1 : i32, i32, i32
  }
  func.func @transform_6(%arg0: i32, %arg1: i32) -> (i32, i32, i32) {
    %c0_i32 = arith.constant 0 : i32
    %c0_i32_0 = arith.constant 0 : i32
    %c0_i32_1 = arith.constant 0 : i32
    %c0_i32_2 = arith.constant 0 : i32
    return %c0_i32, %c0_i32_0, %c0_i32_1 : i32, i32, i32
  }
  func.func @transform_7(%arg0: i32, %arg1: i32) -> (i32, i32, i32) {
    %c0_i32 = arith.constant 0 : i32
    %c0_i32_0 = arith.constant 0 : i32
    %c0_i32_1 = arith.constant 0 : i32
    %c0_i32_2 = arith.constant 0 : i32
    return %c0_i32, %c0_i32_0, %c0_i32_1 : i32, i32, i32
  }
  func.func @transform_8(%arg0: i32, %arg1: i32) -> (i32, i32, i32) {
    %c0_i32 = arith.constant 0 : i32
    %c0_i32_0 = arith.constant 0 : i32
    %c0_i32_1 = arith.constant 0 : i32
    %c0_i32_2 = arith.constant 0 : i32
    return %c0_i32, %c0_i32_0, %c0_i32_1 : i32, i32, i32
  }
  func.func @transform_9(%arg0: i32, %arg1: i32) -> (i32, i32) {
    %c0_i32 = arith.constant 0 : i32
    %c0_i32_0 = arith.constant 0 : i32
    %c0_i32_1 = arith.constant 0 : i32
    return %c0_i32, %c0_i32_0 : i32, i32
  }
  func.func @transform_10(%arg0: i32, %arg1: i32) -> (i32, i32) {
    %c0_i32 = arith.constant 0 : i32
    %c0_i32_0 = arith.constant 0 : i32
    %c0_i32_1 = arith.constant 0 : i32
    return %c0_i32, %c0_i32_0 : i32, i32
  }
  func.func @transform_11(%arg0: i32, %arg1: i32) -> (i32, i32) {
    %c0_i32 = arith.constant 0 : i32
    %c0_i32_0 = arith.constant 0 : i32
    %c0_i32_1 = arith.constant 0 : i32
    return %c0_i32, %c0_i32_0 : i32, i32
  }
  func.func @transform_12(%arg0: i32, %arg1: i32) -> (i32, i32) {
    %c0_i32 = arith.constant 0 : i32
    %c0_i32_0 = arith.constant 0 : i32
    %c0_i32_1 = arith.constant 0 : i32
    return %c0_i32, %c0_i32_0 : i32, i32
  }
  func.func @transform_13(%arg0: i32, %arg1: i32) -> (i32, i32) {
    %c0_i32 = arith.constant 0 : i32
    %c0_i32_0 = arith.constant 0 : i32
    %c0_i32_1 = arith.constant 0 : i32
    return %c0_i32, %c0_i32_0 : i32, i32
  }
  func.func @transform_14(%arg0: i32, %arg1: i32) -> (i32, i32) {
    %c0_i32 = arith.constant 0 : i32
    %c0_i32_0 = arith.constant 0 : i32
    %c0_i32_1 = arith.constant 0 : i32
    return %c0_i32, %c0_i32_0 : i32, i32
  }
  func.func @transform_15(%arg0: i32, %arg1: i32) -> (i32, i32, i32) {
    %c0_i32 = arith.constant 0 : i32
    %c0_i32_0 = arith.constant 0 : i32
    return %arg0, %arg1, %c0_i32 : i32, i32, i32
  }
}

</mosaic_0001>

<llo_original>
// kernel: tpu_custom_call.1
$region0: #{tpu_custom_call.1}
  #allocation0 [shape = 'u32[]', space=smem, size = 0x4, offset = 0x4, fixed_abs, tag = 'smem constant byte address 0x4 - core index']
  #allocation1 [shape = 'u32[144,128]{1,0:T(1,128)}', space=vmem, size = 0x12000, scoped, tag = 'internal scratch']
  %s0 = inlined_call_operand.vmem [shape: f32[2,8,32], index: 0, kind: input, shape index: {}]
  %s1 = inlined_call_operand.vmem [shape: f32[2,8,32], index: 1, kind: input, shape index: {}]
  %s2 = inlined_call_operand.vmem [shape: f32[2,1,8], index: 2, kind: input, shape index: {}]
  %s3 = inlined_call_operand.vmem [shape: f32[1,32], index: 3, kind: input, shape index: {}]
  %s4 = inlined_call_operand.vmem [shape: f32[1,32], index: 4, kind: input, shape index: {}]
  %s5 = inlined_call_operand.vmem [shape: bf16[4,32,8], index: 5, kind: input, shape index: {}]
  %s6 = inlined_call_operand.vmem [shape: bf16[4,32,8], index: 6, kind: input, shape index: {}]
  %s7 = inlined_call_operand.vmem [shape: bf16[4,32,8], index: 7, kind: input, shape index: {}]
  %s8 = inlined_call_operand.vmem [shape: bf16[4,8,32], index: 8, kind: input, shape index: {}]
  %s9 = inlined_call_operand.vmem [shape: f32[1,32], index: 9, kind: input, shape index: {}]
  %s10 = inlined_call_operand.vmem [shape: f32[1,32], index: 10, kind: input, shape index: {}]
  %s11 = inlined_call_operand.vmem [shape: bf16[32,64], index: 11, kind: input, shape index: {}]
  %s12 = inlined_call_operand.vmem [shape: f32[1,64], index: 12, kind: input, shape index: {}]
  %s13 = inlined_call_operand.vmem [shape: bf16[64,32], index: 13, kind: input, shape index: {}]
  %s14 = inlined_call_operand.vmem [shape: f32[1,32], index: 14, kind: input, shape index: {}]
  %s15 = inlined_call_operand.hbm [shape: f32[2,8,32], index: 15, kind: output, shape index: {}]
  %s16 = sld [smem:[#allocation0]]
  $region93: #{tpu_custom_call.1} parent=0
    _
  %s18 = ssub.s32 1, %s16
  %s19 = scalar_select 0, %s18, %s16
  $region1: #{tpu_custom_call.1} parent=0
    #allocation2 [shape = 'u8[8192]{0}', space=vmem, size = 0x2000, scoped, tag = 'output window, operand 0']
    #allocation3 [shape = 's32[2]{0}', space=sflag, size = 0x8, scoped, tag = 'scoped memory for tpu_custom_call.1']
    %20 = vsyncpa [#allocation3], 0
    %s21 = scalar_lea.sflag [#allocation3], 1
    %22 = vsyncpa %s21, 0
    loop: start=0, step=1, limit=4
    $region2: #{tpu_custom_call.1} parent=1 // loop_pre_header
      _
    $region3: #{tpu_custom_call.1} parent=1 // loop_header
      %s24 = sphi 0, %s28
      %p25 = scmp.ge.s32.totalorder %s24, 4
      %s31 = sphi 0, %s43
      %s32 = sphi 0, %s39
      %s33 = sphi 0, %s31
      %s34 = sphi 0, %s32
      %s35 = sphi 0, %s33
      %s36 = sphi 0, %s34
      %s48 = sphi 0, %s50
      %s51 = sphi 0, %s48
      %s52 = sphi 0, %s51
      %s68 = sphi 0, %s52
      %s74 = sphi 0, %s76
      %s77 = sphi 0, %s74
      %s78 = sphi 0, %s77
      %s94 = sphi 0, %s78
      %s100 = sphi 0, %s102
      %s103 = sphi 0, %s100
      %s104 = sphi 0, %s103
      %s120 = sphi 0, %s104
      %s124 = sphi 0, %s124
      %s126 = sphi 0, %s124
      %s127 = sphi 0, %s126
      %s141 = sphi 0, %s127
      %s145 = sphi 0, %s145
      %s147 = sphi 0, %s145
      %s148 = sphi 0, %s147
      %s162 = sphi 0, %s148
      %s166 = sphi 0, %s166
      %s168 = sphi 0, %s166
      %s169 = sphi 0, %s168
      %s183 = sphi 0, %s169
      %s187 = sphi 0, %s187
      %s189 = sphi 0, %s187
      %s190 = sphi 0, %s189
      %s204 = sphi 0, %s190
      %s208 = sphi 0, %s208
      %s210 = sphi 0, %s208
      %s211 = sphi 0, %s210
      %s225 = sphi 0, %s211
      %s229 = sphi 0, %s229
      %s231 = sphi 0, %s229
      %s232 = sphi 0, %s231
      %s246 = sphi 0, %s232
      %s250 = sphi 0, %s250
      %s252 = sphi 0, %s250
      %s253 = sphi 0, %s252
      %s267 = sphi 0, %s253
      %s271 = sphi 0, %s271
      %s273 = sphi 0, %s271
      %s274 = sphi 0, %s273
      %s288 = sphi 0, %s274
      %s292 = sphi 0, %s292
      %s294 = sphi 0, %s292
      %s295 = sphi 0, %s294
      %s309 = sphi 0, %s295
      %s313 = sphi 0, %s313
      %s315 = sphi 0, %s313
      %s316 = sphi 0, %s315
      %s330 = sphi 0, %s316
      %s334 = sphi 0, %s334
      %s336 = sphi 0, %s334
      %s337 = sphi 0, %s336
      %s351 = sphi 0, %s337
      %s355 = sphi 0, %s355
      %s357 = sphi 0, %s355
      %s358 = sphi 0, %s357
      %s372 = sphi 0, %s358
      %s380 = sphi 0, %s382
      %s383 = sphi 0, %s380
      %s384 = sphi 0, %s383
      %s400 = sphi 0, %s384
    $region4: #{tpu_custom_call.1} parent=1 // loop_header_branch
      %27 = sbr.rel (%p25) target = $region8
    $region5: #{tpu_custom_call.1} parent=1 // loop_body
      %s29 = ssub.s32 %s24, 1
      %s30 = ssub.s32 %s24, 2
      %s37 = sadd.s32 1, %s32
      %p38 = scmp.ge.s32.totalorder %s37, 1
      %s39 = scalar_select %p38, 0, %s37
      %s40 = sadd.s32 1, %s31
      %s41 = scalar_select %p38, %s40, %s31
      %p42 = scmp.ge.s32.totalorder %s41, 2
      %s43 = scalar_select %p42, 0, %s41
      %s44 = ssub.s32 %s31, %s43
      %s45 = ssub.s32 %s32, %s39
      %s46 = sor.u32 %s44, %s45
      %p47 = scmp.eq.s32.totalorder %s46, 0
      %s49 = sadd.s32 %s48, 1
      %s50 = scalar_select %p47, %s48, %s49
      %p53 = pneg %p47
      %p54 = scmp.eq.s32.totalorder %s24, 1
      %p55 = por %p53, %p54
      %p56 = scmp.ne.s32.totalorder %s48, %s51
      %p57 = scmp.eq.s32.totalorder %s24, 0
      %p58 = por %p56, %p57
      %p59 = scmp.ne.s32.totalorder %s48, %s51
      %p60 = scmp.eq.s32.totalorder %s29, 1
      %p61 = por %p59, %p60
      %p62 = scmp.ne.s32.totalorder %s51, %s52
      %p63 = scmp.eq.s32.totalorder %s29, 0
      %p64 = por %p62, %p63
      %p65 = scmp.ne.s32.totalorder %s51, %s52
      %p66 = scmp.eq.s32.totalorder %s30, 1
      %p67 = por %p65, %p66
      %p69 = scmp.ne.s32.totalorder %s52, %s68
      %p70 = scmp.eq.s32.totalorder %s30, 0
      %p71 = por %p69, %p70
      %s72 = ssub.s32 %s31, %s43
      %p73 = scmp.eq.s32.totalorder %s72, 0
      %s75 = sadd.s32 %s74, 1
      %s76 = scalar_select %p73, %s74, %s75
      %p79 = pneg %p73
      %p80 = scmp.eq.s32.totalorder %s24, 1
      %p81 = por %p79, %p80
      %p82 = scmp.ne.s32.totalorder %s74, %s77
      %p83 = scmp.eq.s32.totalorder %s24, 0
      %p84 = por %p82, %p83
      %p85 = scmp.ne.s32.totalorder %s74, %s77
      %p86 = scmp.eq.s32.totalorder %s29, 1
      %p87 = por %p85, %p86
      %p88 = scmp.ne.s32.totalorder %s77, %s78
      %p89 = scmp.eq.s32.totalorder %s29, 0
      %p90 = por %p88, %p89
      %p91 = scmp.ne.s32.totalorder %s77, %s78
      %p92 = scmp.eq.s32.totalorder %s30, 1
      %p93 = por %p91, %p92
      %p95 = scmp.ne.s32.totalorder %s78, %s94
      %p96 = scmp.eq.s32.totalorder %s30, 0
      %p97 = por %p95, %p96
      %s98 = ssub.s32 %s31, %s43
      %p99 = scmp.eq.s32.totalorder %s98, 0
      %s101 = sadd.s32 %s100, 1
      %s102 = scalar_select %p99, %s100, %s101
      %p105 = pneg %p99
      %p106 = scmp.eq.s32.totalorder %s24, 1
      %p107 = por %p105, %p106
      %p108 = scmp.ne.s32.totalorder %s100, %s103
      %p109 = scmp.eq.s32.totalorder %s24, 0
      %p110 = por %p108, %p109
      %p111 = scmp.ne.s32.totalorder %s100, %s103
      %p112 = scmp.eq.s32.totalorder %s29, 1
      %p113 = por %p111, %p112
      %p114 = scmp.ne.s32.totalorder %s103, %s104
      %p115 = scmp.eq.s32.totalorder %s29, 0
      %p116 = por %p114, %p115
      %p117 = scmp.ne.s32.totalorder %s103, %s104
      %p118 = scmp.eq.s32.totalorder %s30, 1
      %p119 = por %p117, %p118
      %p121 = scmp.ne.s32.totalorder %s104, %s120
      %p122 = scmp.eq.s32.totalorder %s30, 0
      %p123 = por %p121, %p122
      %s125 = sadd.s32 %s124, 1
      %p128 = scmp.eq.s32.totalorder %s24, 1
      %p129 = scmp.ne.s32.totalorder %s124, %s126
      %p130 = scmp.eq.s32.totalorder %s24, 0
      %p131 = por %p129, %p130
      %p132 = scmp.ne.s32.totalorder %s124, %s126
      %p133 = scmp.eq.s32.totalorder %s29, 1
      %p134 = por %p132, %p133
      %p135 = scmp.ne.s32.totalorder %s126, %s127
      %p136 = scmp.eq.s32.totalorder %s29, 0
      %p137 = por %p135, %p136
      %p138 = scmp.ne.s32.totalorder %s126, %s127
      %p139 = scmp.eq.s32.totalorder %s30, 1
      %p140 = por %p138, %p139
      %p142 = scmp.ne.s32.totalorder %s127, %s141
      %p143 = scmp.eq.s32.totalorder %s30, 0
      %p144 = por %p142, %p143
      %s146 = sadd.s32 %s145, 1
      %p149 = scmp.eq.s32.totalorder %s24, 1
      %p150 = scmp.ne.s32.totalorder %s145, %s147
      %p151 = scmp.eq.s32.totalorder %s24, 0
      %p152 = por %p150, %p151
      %p153 = scmp.ne.s32.totalorder %s145, %s147
      %p154 = scmp.eq.s32.totalorder %s29, 1
      %p155 = por %p153, %p154
      %p156 = scmp.ne.s32.totalorder %s147, %s148
      %p157 = scmp.eq.s32.totalorder %s29, 0
      %p158 = por %p156, %p157
      %p159 = scmp.ne.s32.totalorder %s147, %s148
      %p160 = scmp.eq.s32.totalorder %s30, 1
      %p161 = por %p159, %p160
      %p163 = scmp.ne.s32.totalorder %s148, %s162
      %p164 = scmp.eq.s32.totalorder %s30, 0
      %p165 = por %p163, %p164
      %s167 = sadd.s32 %s166, 1
      %p170 = scmp.eq.s32.totalorder %s24, 1
      %p171 = scmp.ne.s32.totalorder %s166, %s168
      %p172 = scmp.eq.s32.totalorder %s24, 0
      %p173 = por %p171, %p172
      %p174 = scmp.ne.s32.totalorder %s166, %s168
      %p175 = scmp.eq.s32.totalorder %s29, 1
      %p176 = por %p174, %p175
      %p177 = scmp.ne.s32.totalorder %s168, %s169
      %p178 = scmp.eq.s32.totalorder %s29, 0
      %p179 = por %p177, %p178
      %p180 = scmp.ne.s32.totalorder %s168, %s169
      %p181 = scmp.eq.s32.totalorder %s30, 1
      %p182 = por %p180, %p181
      %p184 = scmp.ne.s32.totalorder %s169, %s183
      %p185 = scmp.eq.s32.totalorder %s30, 0
      %p186 = por %p184, %p185
      %s188 = sadd.s32 %s187, 1
      %p191 = scmp.eq.s32.totalorder %s24, 1
      %p192 = scmp.ne.s32.totalorder %s187, %s189
      %p193 = scmp.eq.s32.totalorder %s24, 0
      %p194 = por %p192, %p193
      %p195 = scmp.ne.s32.totalorder %s187, %s189
      %p196 = scmp.eq.s32.totalorder %s29, 1
      %p197 = por %p195, %p196
      %p198 = scmp.ne.s32.totalorder %s189, %s190
      %p199 = scmp.eq.s32.totalorder %s29, 0
      %p200 = por %p198, %p199
      %p201 = scmp.ne.s32.totalorder %s189, %s190
      %p202 = scmp.eq.s32.totalorder %s30, 1
      %p203 = por %p201, %p202
      %p205 = scmp.ne.s32.totalorder %s190, %s204
      %p206 = scmp.eq.s32.totalorder %s30, 0
      %p207 = por %p205, %p206
      %s209 = sadd.s32 %s208, 1
      %p212 = scmp.eq.s32.totalorder %s24, 1
      %p213 = scmp.ne.s32.totalorder %s208, %s210
      %p214 = scmp.eq.s32.totalorder %s24, 0
      %p215 = por %p213, %p214
      %p216 = scmp.ne.s32.totalorder %s208, %s210
      %p217 = scmp.eq.s32.totalorder %s29, 1
      %p218 = por %p216, %p217
      %p219 = scmp.ne.s32.totalorder %s210, %s211
      %p220 = scmp.eq.s32.totalorder %s29, 0
      %p221 = por %p219, %p220
      %p222 = scmp.ne.s32.totalorder %s210, %s211
      %p223 = scmp.eq.s32.totalorder %s30, 1
      %p224 = por %p222, %p223
      %p226 = scmp.ne.s32.totalorder %s211, %s225
      %p227 = scmp.eq.s32.totalorder %s30, 0
      %p228 = por %p226, %p227
      %s230 = sadd.s32 %s229, 1
      %p233 = scmp.eq.s32.totalorder %s24, 1
      %p234 = scmp.ne.s32.totalorder %s229, %s231
      %p235 = scmp.eq.s32.totalorder %s24, 0
      %p236 = por %p234, %p235
      %p237 = scmp.ne.s32.totalorder %s229, %s231
      %p238 = scmp.eq.s32.totalorder %s29, 1
      %p239 = por %p237, %p238
      %p240 = scmp.ne.s32.totalorder %s231, %s232
      %p241 = scmp.eq.s32.totalorder %s29, 0
      %p242 = por %p240, %p241
      %p243 = scmp.ne.s32.totalorder %s231, %s232
      %p244 = scmp.eq.s32.totalorder %s30, 1
      %p245 = por %p243, %p244
      %p247 = scmp.ne.s32.totalorder %s232, %s246
      %p248 = scmp.eq.s32.totalorder %s30, 0
      %p249 = por %p247, %p248
      %s251 = sadd.s32 %s250, 1
      %p254 = scmp.eq.s32.totalorder %s24, 1
      %p255 = scmp.ne.s32.totalorder %s250, %s252
      %p256 = scmp.eq.s32.totalorder %s24, 0
      %p257 = por %p255, %p256
      %p258 = scmp.ne.s32.totalorder %s250, %s252
      %p259 = scmp.eq.s32.totalorder %s29, 1
      %p260 = por %p258, %p259
      %p261 = scmp.ne.s32.totalorder %s252, %s253
      %p262 = scmp.eq.s32.totalorder %s29, 0
      %p263 = por %p261, %p262
      %p264 = scmp.ne.s32.totalorder %s252, %s253
      %p265 = scmp.eq.s32.totalorder %s30, 1
      %p266 = por %p264, %p265
      %p268 = scmp.ne.s32.totalorder %s253, %s267
      %p269 = scmp.eq.s32.totalorder %s30, 0
      %p270 = por %p268, %p269
      %s272 = sadd.s32 %s271, 1
      %p275 = scmp.eq.s32.totalorder %s24, 1
      %p276 = scmp.ne.s32.totalorder %s271, %s273
      %p277 = scmp.eq.s32.totalorder %s24, 0
      %p278 = por %p276, %p277
      %p279 = scmp.ne.s32.totalorder %s271, %s273
      %p280 = scmp.eq.s32.totalorder %s29, 1
      %p281 = por %p279, %p280
      %p282 = scmp.ne.s32.totalorder %s273, %s274
      %p283 = scmp.eq.s32.totalorder %s29, 0
      %p284 = por %p282, %p283
      %p285 = scmp.ne.s32.totalorder %s273, %s274
      %p286 = scmp.eq.s32.totalorder %s30, 1
      %p287 = por %p285, %p286
      %p289 = scmp.ne.s32.totalorder %s274, %s288
      %p290 = scmp.eq.s32.totalorder %s30, 0
      %p291 = por %p289, %p290
      %s293 = sadd.s32 %s292, 1
      %p296 = scmp.eq.s32.totalorder %s24, 1
      %p297 = scmp.ne.s32.totalorder %s292, %s294
      %p298 = scmp.eq.s32.totalorder %s24, 0
      %p299 = por %p297, %p298
      %p300 = scmp.ne.s32.totalorder %s292, %s294
      %p301 = scmp.eq.s32.totalorder %s29, 1
      %p302 = por %p300, %p301
      %p303 = scmp.ne.s32.totalorder %s294, %s295
      %p304 = scmp.eq.s32.totalorder %s29, 0
      %p305 = por %p303, %p304
      %p306 = scmp.ne.s32.totalorder %s294, %s295
      %p307 = scmp.eq.s32.totalorder %s30, 1
      %p308 = por %p306, %p307
      %p310 = scmp.ne.s32.totalorder %s295, %s309
      %p311 = scmp.eq.s32.totalorder %s30, 0
      %p312 = por %p310, %p311
      %s314 = sadd.s32 %s313, 1
      %p317 = scmp.eq.s32.totalorder %s24, 1
      %p318 = scmp.ne.s32.totalorder %s313, %s315
      %p319 = scmp.eq.s32.totalorder %s24, 0
      %p320 = por %p318, %p319
      %p321 = scmp.ne.s32.totalorder %s313, %s315
      %p322 = scmp.eq.s32.totalorder %s29, 1
      %p323 = por %p321, %p322
      %p324 = scmp.ne.s32.totalorder %s315, %s316
      %p325 = scmp.eq.s32.totalorder %s29, 0
      %p326 = por %p324, %p325
      %p327 = scmp.ne.s32.totalorder %s315, %s316
      %p328 = scmp.eq.s32.totalorder %s30, 1
      %p329 = por %p327, %p328
      %p331 = scmp.ne.s32.totalorder %s316, %s330
      %p332 = scmp.eq.s32.totalorder %s30, 0
      %p333 = por %p331, %p332
      %s335 = sadd.s32 %s334, 1
      %p338 = scmp.eq.s32.totalorder %s24, 1
      %p339 = scmp.ne.s32.totalorder %s334, %s336
      %p340 = scmp.eq.s32.totalorder %s24, 0
      %p341 = por %p339, %p340
      %p342 = scmp.ne.s32.totalorder %s334, %s336
      %p343 = scmp.eq.s32.totalorder %s29, 1
      %p344 = por %p342, %p343
      %p345 = scmp.ne.s32.totalorder %s336, %s337
      %p346 = scmp.eq.s32.totalorder %s29, 0
      %p347 = por %p345, %p346
      %p348 = scmp.ne.s32.totalorder %s336, %s337
      %p349 = scmp.eq.s32.totalorder %s30, 1
      %p350 = por %p348, %p349
      %p352 = scmp.ne.s32.totalorder %s337, %s351
      %p353 = scmp.eq.s32.totalorder %s30, 0
      %p354 = por %p352, %p353
      %s356 = sadd.s32 %s355, 1
      %p359 = scmp.eq.s32.totalorder %s24, 1
      %p360 = scmp.ne.s32.totalorder %s355, %s357
      %p361 = scmp.eq.s32.totalorder %s24, 0
      %p362 = por %p360, %p361
      %p363 = scmp.ne.s32.totalorder %s355, %s357
      %p364 = scmp.eq.s32.totalorder %s29, 1
      %p365 = por %p363, %p364
      %p366 = scmp.ne.s32.totalorder %s357, %s358
      %p367 = scmp.eq.s32.totalorder %s29, 0
      %p368 = por %p366, %p367
      %p369 = scmp.ne.s32.totalorder %s357, %s358
      %p370 = scmp.eq.s32.totalorder %s30, 1
      %p371 = por %p369, %p370
      %p373 = scmp.ne.s32.totalorder %s358, %s372
      %p374 = scmp.eq.s32.totalorder %s30, 0
      %p375 = por %p373, %p374
      %s376 = ssub.s32 %s31, %s43
      %s377 = ssub.s32 %s32, %s39
      %s378 = sor.u32 %s376, %s377
      %p379 = scmp.eq.s32.totalorder %s378, 0
      %s381 = sadd.s32 %s380, 1
      %s382 = scalar_select %p379, %s380, %s381
      %p385 = pneg %p379
      %p386 = scmp.eq.s32.totalorder %s24, 1
      %p387 = por %p385, %p386
      %p388 = scmp.ne.s32.totalorder %s380, %s383
      %p389 = scmp.eq.s32.totalorder %s24, 0
      %p390 = por %p388, %p389
      %p391 = scmp.ne.s32.totalorder %s380, %s383
      %p392 = scmp.eq.s32.totalorder %s29, 1
      %p393 = por %p391, %p392
      %p394 = scmp.ne.s32.totalorder %s383, %s384
      %p395 = scmp.eq.s32.totalorder %s29, 0
      %p396 = por %p394, %p395
      %p397 = scmp.ne.s32.totalorder %s383, %s384
      %p398 = scmp.eq.s32.totalorder %s30, 1
      %p399 = por %p397, %p398
      %p401 = scmp.ne.s32.totalorder %s384, %s400
      %p402 = scmp.eq.s32.totalorder %s30, 0
      %p403 = por %p401, %p402
      %p404 = scmp.le.s32.totalorder 1, %s24
      %p405 = scmp.lt.s32.totalorder %s24, 3
      %p406 = pnand %p404, %p405
      %p407 = pneg %p406
      // Predicated region
      $region9: #{tpu_custom_call.1} parent=5 // pred_check
        _
      $region10: #{tpu_custom_call.1} parent=5 // pred_check_branch
        %409 = sbr.rel (%p406) target = $region12
      $region11: #{tpu_custom_call.1} parent=5 // pred_region
        %s410 = ssub.s32 %s24, 1
        // Predicated region
        $region13: #{tpu_custom_call.1} parent=11 // pred_check
          %p411 = pneg %p137
        $region14: #{tpu_custom_call.1} parent=11 // pred_check_branch
          %413 = sbr.rel (%p411) target = $region16
        $region15: #{tpu_custom_call.1} parent=11 // pred_region
          _
        $region16: #{tpu_custom_call.1} parent=11 // pred_fallthru
          _
        // Predicated region
        $region17: #{tpu_custom_call.1} parent=11 // pred_check
          %p414 = pneg %p158
        $region18: #{tpu_custom_call.1} parent=11 // pred_check_branch
          %416 = sbr.rel (%p414) target = $region20
        $region19: #{tpu_custom_call.1} parent=11 // pred_region
          _
        $region20: #{tpu_custom_call.1} parent=11 // pred_fallthru
          _
        // Predicated region
        $region21: #{tpu_custom_call.1} parent=11 // pred_check
          %p417 = pneg %p179
        $region22: #{tpu_custom_call.1} parent=11 // pred_check_branch
          %419 = sbr.rel (%p417) target = $region24
        $region23: #{tpu_custom_call.1} parent=11 // pred_region
          _
        $region24: #{tpu_custom_call.1} parent=11 // pred_fallthru
          _
        // Predicated region
        $region25: #{tpu_custom_call.1} parent=11 // pred_check
          %p420 = pneg %p200
        $region26: #{tpu_custom_call.1} parent=11 // pred_check_branch
          %422 = sbr.rel (%p420) target = $region28
        $region27: #{tpu_custom_call.1} parent=11 // pred_region
          _
        $region28: #{tpu_custom_call.1} parent=11 // pred_fallthru
          _
        // Predicated region
        $region29: #{tpu_custom_call.1} parent=11 // pred_check
          %p423 = pneg %p221
        $region30: #{tpu_custom_call.1} parent=11 // pred_check_branch
          %425 = sbr.rel (%p423) target = $region32
        $region31: #{tpu_custom_call.1} parent=11 // pred_region
          _
        $region32: #{tpu_custom_call.1} parent=11 // pred_fallthru
          _
        // Predicated region
        $region33: #{tpu_custom_call.1} parent=11 // pred_check
          %p426 = pneg %p242
        $region34: #{tpu_custom_call.1} parent=11 // pred_check_branch
          %428 = sbr.rel (%p426) target = $region36
        $region35: #{tpu_custom_call.1} parent=11 // pred_region
          _
        $region36: #{tpu_custom_call.1} parent=11 // pred_fallthru
          _
        // Predicated region
        $region37: #{tpu_custom_call.1} parent=11 // pred_check
          %p429 = pneg %p263
        $region38: #{tpu_custom_call.1} parent=11 // pred_check_branch
          %431 = sbr.rel (%p429) target = $region40
        $region39: #{tpu_custom_call.1} parent=11 // pred_region
          _
        $region40: #{tpu_custom_call.1} parent=11 // pred_fallthru
          _
        // Predicated region
        $region41: #{tpu_custom_call.1} parent=11 // pred_check
          %p432 = pneg %p284
        $region42: #{tpu_custom_call.1} parent=11 // pred_check_branch
          %434 = sbr.rel (%p432) target = $region44
        $region43: #{tpu_custom_call.1} parent=11 // pred_region
          _
        $region44: #{tpu_custom_call.1} parent=11 // pred_fallthru
          _
        // Predicated region
        $region45: #{tpu_custom_call.1} parent=11 // pred_check
          %p435 = pneg %p305
        $region46: #{tpu_custom_call.1} parent=11 // pred_check_branch
          %437 = sbr.rel (%p435) target = $region48
        $region47: #{tpu_custom_call.1} parent=11 // pred_region
          _
        $region48: #{tpu_custom_call.1} parent=11 // pred_fallthru
          _
        // Predicated region
        $region49: #{tpu_custom_call.1} parent=11 // pred_check
          %p438 = pneg %p326
        $region50: #{tpu_custom_call.1} parent=11 // pred_check_branch
          %440 = sbr.rel (%p438) target = $region52
        $region51: #{tpu_custom_call.1} parent=11 // pred_region
          _
        $region52: #{tpu_custom_call.1} parent=11 // pred_fallthru
          _
        // Predicated region
        $region53: #{tpu_custom_call.1} parent=11 // pred_check
          %p441 = pneg %p347
        $region54: #{tpu_custom_call.1} parent=11 // pred_check_branch
          %443 = sbr.rel (%p441) target = $region56
        $region55: #{tpu_custom_call.1} parent=11 // pred_region
          _
        $region56: #{tpu_custom_call.1} parent=11 // pred_fallthru
          _
        // Predicated region
        $region57: #{tpu_custom_call.1} parent=11 // pred_check
          %p444 = pneg %p368
        $region58: #{tpu_custom_call.1} parent=11 // pred_check_branch
          %446 = sbr.rel (%p444) target = $region60
        $region59: #{tpu_custom_call.1} parent=11 // pred_region
          _
        $region60: #{tpu_custom_call.1} parent=11 // pred_fallthru
          _
      $region12: #{tpu_custom_call.1} parent=5 // pred_fallthru
        _
      %p447 = scmp.lt.s32.totalorder %s24, 2
      // Predicated region
      $region61: #{tpu_custom_call.1} parent=5 // pred_check
        %p448 = pneg %p447
      $region62: #{tpu_custom_call.1} parent=5 // pred_check_branch
        %450 = sbr.rel (%p448) target = $region64
      $region63: #{tpu_custom_call.1} parent=5 // pred_region
        // Predicated region
        $region65: #{tpu_custom_call.1} parent=63 // pred_check
          %p451 = pneg %p58
        $region66: #{tpu_custom_call.1} parent=63 // pred_check_branch
          %453 = sbr.rel (%p451) target = $region68
        $region67: #{tpu_custom_call.1} parent=63 // pred_region
          %p454 = scmp.lt.s32.totalorder %s31, 1
          %s455 = scalar_select %p454, %s31, 1
          %p456 = scmp.lt.s32.totalorder %s32, 0
          %s457 = scalar_select %p456, %s32, 0
          %s458 = sadd.s32 %s457, %s455
          %s459 = smul.addr %s458, 8
          %s460 = scalar_lea.vmem %s0, %s459
        $region68: #{tpu_custom_call.1} parent=63 // pred_fallthru
          _
        // Predicated region
        $region69: #{tpu_custom_call.1} parent=63 // pred_check
          %p461 = pneg %p84
        $region70: #{tpu_custom_call.1} parent=63 // pred_check_branch
          %463 = sbr.rel (%p461) target = $region72
        $region71: #{tpu_custom_call.1} parent=63 // pred_region
          %p464 = scmp.lt.s32.totalorder %s31, 1
          %s465 = scalar_select %p464, %s31, 1
          %s466 = smul.addr %s465, 8
          %s467 = scalar_lea.vmem %s1, %s466
        $region72: #{tpu_custom_call.1} parent=63 // pred_fallthru
          _
        // Predicated region
        $region73: #{tpu_custom_call.1} parent=63 // pred_check
          %p468 = pneg %p110
        $region74: #{tpu_custom_call.1} parent=63 // pred_check_branch
          %470 = sbr.rel (%p468) target = $region76
        $region75: #{tpu_custom_call.1} parent=63 // pred_region
          %p471 = scmp.lt.s32.totalorder %s31, 1
          %s472 = scalar_select %p471, %s31, 1
          %s473 = scalar_lea.vmem %s2, %s472
        $region76: #{tpu_custom_call.1} parent=63 // pred_fallthru
          _
      $region64: #{tpu_custom_call.1} parent=5 // pred_fallthru
        _
      %p474 = scmp.le.s32.totalorder 1, %s24
      %p475 = scmp.lt.s32.totalorder %s24, 3
      %p476 = pnand %p474, %p475
      %p477 = pneg %p476
      // Predicated region
      $region77: #{tpu_custom_call.1} parent=5 // pred_check
        _
      $region78: #{tpu_custom_call.1} parent=5 // pred_check_branch
        %479 = sbr.rel (%p476) target = $region80
      $region79: #{tpu_custom_call.1} parent=5 // pred_region
        %s480 = ssub.s32 %s24, 1
        %p481 = scmp.lt.s32.totalorder %s33, 1
        %s482 = scalar_select %p481, %s33, 1
        %p483 = scmp.lt.s32.totalorder %s34, 0
        %s484 = scalar_select %p483, %s34, 0
        %s485 = sadd.s32 %s484, %s482
        %s486 = smul.addr %s485, 8
        %s487 = scalar_lea.vmem %s0, %s486
        %p488 = pneg %p64
        %p489 = pneg %p61
        %p490 = scmp.lt.s32.totalorder %s33, 1
        %s491 = scalar_select %p490, %s33, 1
        %s492 = smul.addr %s491, 8
        %s493 = scalar_lea.vmem %s1, %s492
        %p494 = pneg %p90
        %p495 = pneg %p87
        %p496 = scmp.lt.s32.totalorder %s33, 1
        %s497 = scalar_select %p496, %s33, 1
        %s498 = scalar_lea.vmem %s2, %s497
        %p499 = pneg %p116
        %p500 = pneg %p113
        %p501 = pneg %p137
        %p502 = pneg %p134
        %p503 = pneg %p158
        %p504 = pneg %p155
        %p505 = pneg %p179
        %p506 = pneg %p176
        %p507 = pneg %p200
        %p508 = pneg %p197
        %p509 = pneg %p221
        %p510 = pneg %p218
        %p511 = pneg %p242
        %p512 = pneg %p239
        %p513 = pneg %p263
        %p514 = pneg %p260
        %p515 = pneg %p284
        %p516 = pneg %p281
        %p517 = pneg %p305
        %p518 = pneg %p302
        %p519 = pneg %p326
        %p520 = pneg %p323
        %p521 = pneg %p347
        %p522 = pneg %p344
        %p523 = pneg %p368
        %p524 = pneg %p365
        %p525 = pneg %p396
        %p526 = pneg %p393
        %s527 = sand.u32 %s383, 1
        %s528 = scalar_lea.sflag [#allocation3], %s527
        %s529 = sand.u32 %s383, 1
        %s530 = smul.addr %s529, 8
        %s531 = scalar_lea.vmem [#allocation2], %s530
        %p532 = scmp.lt.s32.totalorder %s33, 1
        %s533 = scalar_select %p532, %s33, 1
        %p534 = scmp.lt.s32.totalorder %s34, 0
        %s535 = scalar_select %p534, %s34, 0
        %s536 = sadd.s32 %s535, %s533
        %s537 = smul.addr %s536, 8
        %s538 = scalar_lea.vmem %s0, %s537
        %p539 = scmp.lt.s32.totalorder %s33, 1
        %s540 = scalar_select %p539, %s33, 1
        %s541 = smul.addr %s540, 8
        %s542 = scalar_lea.vmem %s1, %s541
        %p543 = scmp.lt.s32.totalorder %s33, 1
        %s544 = scalar_select %p543, %s33, 1
        %s545 = scalar_lea.vmem %s2, %s544
        %v547 = vld [vmem:[%s538] sm:$0xff]
        %v548 = vld [vmem:[%s542] sm:$0xff]
        %vm549 = vcmask 261120
        %v550 = vsel %vm549, %v547, 0.0
        %551 = vadd.xlane.f32.xlu0 %v550
        %v552 = vpop.xlane.xlu0 %551
        %v553 = vrcp.pop 32.0
        %v554 = vmul.f32 %v552, %v553
        %v555 = vsub.f32 %v547, %v554
        %v556 = vmul.f32 %v555, %v555
        %v557 = vsel %vm549, %v556, 0.0
        %558 = vadd.xlane.f32.xlu0 %v557
        %v559 = vpop.xlane.xlu0 %558
        %v560 = vmul.f32 %v559, %v553
        %v561 = vadd.f32 %v560, 1e-05
        %v562 = vrsqrt.pop %v561
        %v563 = vmul.f32 %v555, %v562
        %v564 = vld [vmem:[%s3] sm:$0x1]
        %v566 = vlaneseq
        %v567 = vshrl.u32 %v566, 7
        %v568 = vsub.s32 0, %v567
        %v569 = vrot.slane %v564, %v568
        %v571 = vmul.f32 %v563, %v569
        %v572 = vld [vmem:[%s4] sm:$0x1]
        %v574 = vlaneseq
        %v575 = vshrl.u32 %v574, 7
        %v576 = vsub.s32 0, %v575
        %v577 = vrot.slane %v572, %v576
        %v579 = vadd.f32 %v571, %v577
        %v580 = vpack.c.bf16 %v579, %v579
        %v581 = vsel %vm549, %v548, 0.0
        %582 = vadd.xlane.f32.xlu0 %v581
        %v583 = vpop.xlane.xlu0 %582
        %v584 = vmul.f32 %v583, %v553
        %v585 = vsub.f32 %v548, %v584
        %v586 = vmul.f32 %v585, %v585
        %v587 = vsel %vm549, %v586, 0.0
        %588 = vadd.xlane.f32.xlu0 %v587
        %v589 = vpop.xlane.xlu0 %588
        %v590 = vmul.f32 %v589, %v553
        %v591 = vadd.f32 %v590, 1e-05
        %v592 = vrsqrt.pop %v591
        %v593 = vmul.f32 %v585, %v592
        %v594 = vmul.f32 %v593, %v569
        %v595 = vadd.f32 %v594, %v577
        %v596 = vpack.c.bf16 %v595, %v595
        %v597 = vld [vmem:[%s5] sm:$0xf]
        %v598 = vld [vmem:[%s5 + $0x4] sm:$0xf]
        %v599 = vld [vmem:[%s5 + $0x8] sm:$0xf]
        %v600 = vld [vmem:[%s5 + $0xc] sm:$0xf]
        %v601 = vld [vmem:[%s5 + $0x10] sm:$0xf]
        %v602 = vld [vmem:[%s5 + $0x14] sm:$0xf]
        %v603 = vld [vmem:[%s5 + $0x18] sm:$0xf]
        %v604 = vld [vmem:[%s5 + $0x1c] sm:$0xf]
        %v605 = vld [vmem:[%s5 + $0x20] sm:$0xf]
        %v606 = vld [vmem:[%s5 + $0x24] sm:$0xf]
        %v607 = vld [vmem:[%s5 + $0x28] sm:$0xf]
        %v608 = vld [vmem:[%s5 + $0x2c] sm:$0xf]
        %v609 = vld [vmem:[%s5 + $0x30] sm:$0xf]
        %v610 = vld [vmem:[%s5 + $0x34] sm:$0xf]
        %v611 = vld [vmem:[%s5 + $0x38] sm:$0xf]
        %v612 = vld [vmem:[%s5 + $0x3c] sm:$0xf]
        %v617 = vunpack.c.l.b16 %v597
        %v618 = vunpack.c.l.b16 %v598
        %v619 = vunpack.c.l.b16 %v599
        %v620 = vunpack.c.l.b16 %v600
        %v621 = vpack.c.b16 %v618, %v617
        %v622 = vpack.c.b16 %v620, %v619
        %v626 = vsel %vm549, %v580, 0
        %628 = vmatprep.subr.bf16.mxu0 0
        %629 = vmatpush1.bf16.msra.mxu0 %v621
        %630 = vmatprep.subr.bf16.mxu0 0
        %631 = vmatpush1.bf16.msra.mxu0 %v622
        %632 = vmatprep.subr.bf16.mxu0 0
        %633 = vmatpush1.bf16.msra.mxu0 0
        %634 = vmatprep.subr.bf16.mxu0 0
        %635 = vmatpush1.bf16.msra.mxu0 0
        %636 = vmatprep.subr.bf16.mxu0 0
        %637 = vmatpush1.bf16.msra.mxu0 0
        %638 = vmatprep.subr.bf16.mxu0 0
        %639 = vmatpush1.bf16.msra.mxu0 0
        %640 = vmatprep.subr.bf16.mxu0 0
        %641 = vmatpush1.bf16.msra.mxu0 0
        %642 = vmatprep.subr.bf16.mxu0 0
        %643 = vmatpush1.bf16.msra.mxu0 0
        %644 = vmatprep.subr.bf16.mxu0 0
        %645 = vmatpush1.bf16.msra.mxu0 0
        %646 = vmatprep.subr.bf16.mxu0 0
        %647 = vmatpush1.bf16.msra.mxu0 0
        %648 = vmatprep.subr.bf16.mxu0 0
        %649 = vmatpush1.bf16.msra.mxu0 0
        %650 = vmatprep.subr.bf16.mxu0 0
        %651 = vmatpush1.bf16.msra.mxu0 0
        %652 = vmatprep.subr.bf16.mxu0 0
        %653 = vmatpush1.bf16.msra.mxu0 0
        %654 = vmatprep.subr.bf16.mxu0 0
        %655 = vmatpush1.bf16.msra.mxu0 0
        %656 = vmatprep.subr.bf16.mxu0 0
        %657 = vmatpush1.bf16.msra.mxu0 0
        %658 = vmatprep.subr.bf16.mxu0 0
        %659 = vmatpush1.bf16.msra.mxu0 0
        %660 = vmatprep.mubr.bf16.mxu0 0
        %661 = vmatmul.mubr.bf16.gmra.mrb[0].mxu0 %v626
        %v662 = vpop.f32.mrb[0].mxu0
        %v663 = vadd.f32 0.0, %v662
        %v664 = vpop.f32.mrb[0].mxu0
        %v665 = vpop.f32.mrb[0].mxu0
        %v666 = vpop.f32.mrb[0].mxu0
        %667 = vdwg.mxu0
        %v672 = vunpack.c.l.b16 %v601
        %v673 = vunpack.c.l.b16 %v602
        %v674 = vunpack.c.l.b16 %v603
        %v675 = vunpack.c.l.b16 %v604
        %v676 = vpack.c.b16 %v673, %v672
        %v677 = vpack.c.b16 %v675, %v674
        %680 = vmatprep.subr.bf16.mxu0 0
        %681 = vmatpush1.bf16.msra.mxu0 %v676
        %682 = vmatprep.subr.bf16.mxu0 0
        %683 = vmatpush1.bf16.msra.mxu0 %v677
        %684 = vmatprep.subr.bf16.mxu0 0
        %685 = vmatpush1.bf16.msra.mxu0 0
        %686 = vmatprep.subr.bf16.mxu0 0
        %687 = vmatpush1.bf16.msra.mxu0 0
        %688 = vmatprep.subr.bf16.mxu0 0
        %689 = vmatpush1.bf16.msra.mxu0 0
        %690 = vmatprep.subr.bf16.mxu0 0
        %691 = vmatpush1.bf16.msra.mxu0 0
        %692 = vmatprep.subr.bf16.mxu0 0
        %693 = vmatpush1.bf16.msra.mxu0 0
        %694 = vmatprep.subr.bf16.mxu0 0
        %695 = vmatpush1.bf16.msra.mxu0 0
        %696 = vmatprep.subr.bf16.mxu0 0
        %697 = vmatpush1.bf16.msra.mxu0 0
        %698 = vmatprep.subr.bf16.mxu0 0
        %699 = vmatpush1.bf16.msra.mxu0 0
        %700 = vmatprep.subr.bf16.mxu0 0
        %701 = vmatpush1.bf16.msra.mxu0 0
        %702 = vmatprep.subr.bf16.mxu0 0
        %703 = vmatpush1.bf16.msra.mxu0 0
        %704 = vmatprep.subr.bf16.mxu0 0
        %705 = vmatpush1.bf16.msra.mxu0 0
        %706 = vmatprep.subr.bf16.mxu0 0
        %707 = vmatpush1.bf16.msra.mxu0 0
        %708 = vmatprep.subr.bf16.mxu0 0
        %709 = vmatpush1.bf16.msra.mxu0 0
        %710 = vmatprep.subr.bf16.mxu0 0
        %711 = vmatpush1.bf16.msra.mxu0 0
        %712 = vmatprep.mubr.bf16.mxu0 0
        %713 = vmatmul.mubr.bf16.gmra.mrb[0].mxu0 %v626
        %v714 = vpop.f32.mrb[0].mxu0
        %v715 = vadd.f32 0.0, %v714
        %v716 = vpop.f32.mrb[0].mxu0
        %v717 = vpop.f32.mrb[0].mxu0
        %v718 = vpop.f32.mrb[0].mxu0
        %719 = vdwg.mxu0
        %v724 = vunpack.c.l.b16 %v605
        %v725 = vunpack.c.l.b16 %v606
        %v726 = vunpack.c.l.b16 %v607
        %v727 = vunpack.c.l.b16 %v608
        %v728 = vpack.c.b16 %v725, %v724
        %v729 = vpack.c.b16 %v727, %v726
        %732 = vmatprep.subr.bf16.mxu0 0
        %733 = vmatpush1.bf16.msra.mxu0 %v728
        %734 = vmatprep.subr.bf16.mxu0 0
        %735 = vmatpush1.bf16.msra.mxu0 %v729
        %736 = vmatprep.subr.bf16.mxu0 0
        %737 = vmatpush1.bf16.msra.mxu0 0
        %738 = vmatprep.subr.bf16.mxu0 0
        %739 = vmatpush1.bf16.msra.mxu0 0
        %740 = vmatprep.subr.bf16.mxu0 0
        %741 = vmatpush1.bf16.msra.mxu0 0
        %742 = vmatprep.subr.bf16.mxu0 0
        %743 = vmatpush1.bf16.msra.mxu0 0
        %744 = vmatprep.subr.bf16.mxu0 0
        %745 = vmatpush1.bf16.msra.mxu0 0
        %746 = vmatprep.subr.bf16.mxu0 0
        %747 = vmatpush1.bf16.msra.mxu0 0
        %748 = vmatprep.subr.bf16.mxu0 0
        %749 = vmatpush1.bf16.msra.mxu0 0
        %750 = vmatprep.subr.bf16.mxu0 0
        %751 = vmatpush1.bf16.msra.mxu0 0
        %752 = vmatprep.subr.bf16.mxu0 0
        %753 = vmatpush1.bf16.msra.mxu0 0
        %754 = vmatprep.subr.bf16.mxu0 0
        %755 = vmatpush1.bf16.msra.mxu0 0
        %756 = vmatprep.subr.bf16.mxu0 0
        %757 = vmatpush1.bf16.msra.mxu0 0
        %758 = vmatprep.subr.bf16.mxu0 0
        %759 = vmatpush1.bf16.msra.mxu0 0
        %760 = vmatprep.subr.bf16.mxu0 0
        %761 = vmatpush1.bf16.msra.mxu0 0
        %762 = vmatprep.subr.bf16.mxu0 0
        %763 = vmatpush1.bf16.msra.mxu0 0
        %764 = vmatprep.mubr.bf16.mxu0 0
        %765 = vmatmul.mubr.bf16.gmra.mrb[0].mxu0 %v626
        %v766 = vpop.f32.mrb[0].mxu0
        %v767 = vadd.f32 0.0, %v766
        %v768 = vpop.f32.mrb[0].mxu0
        %v769 = vpop.f32.mrb[0].mxu0
        %v770 = vpop.f32.mrb[0].mxu0
        %771 = vdwg.mxu0
        %v776 = vunpack.c.l.b16 %v609
        %v777 = vunpack.c.l.b16 %v610
        %v778 = vunpack.c.l.b16 %v611
        %v779 = vunpack.c.l.b16 %v612
        %v780 = vpack.c.b16 %v777, %v776
        %v781 = vpack.c.b16 %v779, %v778
        %784 = vmatprep.subr.bf16.mxu0 0
        %785 = vmatpush1.bf16.msra.mxu0 %v780
        %786 = vmatprep.subr.bf16.mxu0 0
        %787 = vmatpush1.bf16.msra.mxu0 %v781
        %788 = vmatprep.subr.bf16.mxu0 0
        %789 = vmatpush1.bf16.msra.mxu0 0
        %790 = vmatprep.subr.bf16.mxu0 0
        %791 = vmatpush1.bf16.msra.mxu0 0
        %792 = vmatprep.subr.bf16.mxu0 0
        %793 = vmatpush1.bf16.msra.mxu0 0
        %794 = vmatprep.subr.bf16.mxu0 0
        %795 = vmatpush1.bf16.msra.mxu0 0
        %796 = vmatprep.subr.bf16.mxu0 0
        %797 = vmatpush1.bf16.msra.mxu0 0
        %798 = vmatprep.subr.bf16.mxu0 0
        %799 = vmatpush1.bf16.msra.mxu0 0
        %800 = vmatprep.subr.bf16.mxu0 0
        %801 = vmatpush1.bf16.msra.mxu0 0
        %802 = vmatprep.subr.bf16.mxu0 0
        %803 = vmatpush1.bf16.msra.mxu0 0
        %804 = vmatprep.subr.bf16.mxu0 0
        %805 = vmatpush1.bf16.msra.mxu0 0
        %806 = vmatprep.subr.bf16.mxu0 0
        %807 = vmatpush1.bf16.msra.mxu0 0
        %808 = vmatprep.subr.bf16.mxu0 0
        %809 = vmatpush1.bf16.msra.mxu0 0
        %810 = vmatprep.subr.bf16.mxu0 0
        %811 = vmatpush1.bf16.msra.mxu0 0
        %812 = vmatprep.subr.bf16.mxu0 0
        %813 = vmatpush1.bf16.msra.mxu0 0
        %814 = vmatprep.subr.bf16.mxu0 0
        %815 = vmatpush1.bf16.msra.mxu0 0
        %816 = vmatprep.mubr.bf16.mxu0 0
        %817 = vmatmul.mubr.bf16.gmra.mrb[0].mxu0 %v626
        %v818 = vpop.f32.mrb[0].mxu0
        %v819 = vadd.f32 0.0, %v818
        %v820 = vpop.f32.mrb[0].mxu0
        %v821 = vpop.f32.mrb[0].mxu0
        %v822 = vpop.f32.mrb[0].mxu0
        %823 = vdwg.mxu0
        %v824 = vmul.f32 %v663, 0.35355338
        %v825 = vmul.f32 %v715, 0.35355338
        %v826 = vmul.f32 %v767, 0.35355338
        %v827 = vmul.f32 %v819, 0.35355338
        %v828 = vld [vmem:[%s6] sm:$0xf]
        %v829 = vld [vmem:[%s6 + $0x4] sm:$0xf]
        %v830 = vld [vmem:[%s6 + $0x8] sm:$0xf]
        %v831 = vld [vmem:[%s6 + $0xc] sm:$0xf]
        %v832 = vld [vmem:[%s6 + $0x10] sm:$0xf]
        %v833 = vld [vmem:[%s6 + $0x14] sm:$0xf]
        %v834 = vld [vmem:[%s6 + $0x18] sm:$0xf]
        %v835 = vld [vmem:[%s6 + $0x1c] sm:$0xf]
        %v836 = vld [vmem:[%s6 + $0x20] sm:$0xf]
        %v837 = vld [vmem:[%s6 + $0x24] sm:$0xf]
        %v838 = vld [vmem:[%s6 + $0x28] sm:$0xf]
        %v839 = vld [vmem:[%s6 + $0x2c] sm:$0xf]
        %v840 = vld [vmem:[%s6 + $0x30] sm:$0xf]
        %v841 = vld [vmem:[%s6 + $0x34] sm:$0xf]
        %v842 = vld [vmem:[%s6 + $0x38] sm:$0xf]
        %v843 = vld [vmem:[%s6 + $0x3c] sm:$0xf]
        %v848 = vunpack.c.l.b16 %v828
        %v849 = vunpack.c.l.b16 %v829
        %v850 = vunpack.c.l.b16 %v830
        %v851 = vunpack.c.l.b16 %v831
        %v852 = vpack.c.b16 %v849, %v848
        %v853 = vpack.c.b16 %v851, %v850
        %v857 = vsel %vm549, %v596, 0
        %859 = vmatprep.subr.bf16.mxu0 0
        %860 = vmatpush1.bf16.msra.mxu0 %v852
        %861 = vmatprep.subr.bf16.mxu0 0
        %862 = vmatpush1.bf16.msra.mxu0 %v853
        %863 = vmatprep.subr.bf16.mxu0 0
        %864 = vmatpush1.bf16.msra.mxu0 0
        %865 = vmatprep.subr.bf16.mxu0 0
        %866 = vmatpush1.bf16.msra.mxu0 0
        %867 = vmatprep.subr.bf16.mxu0 0
        %868 = vmatpush1.bf16.msra.mxu0 0
        %869 = vmatprep.subr.bf16.mxu0 0
        %870 = vmatpush1.bf16.msra.mxu0 0
        %871 = vmatprep.subr.bf16.mxu0 0
        %872 = vmatpush1.bf16.msra.mxu0 0
        %873 = vmatprep.subr.bf16.mxu0 0
        %874 = vmatpush1.bf16.msra.mxu0 0
        %875 = vmatprep.subr.bf16.mxu0 0
        %876 = vmatpush1.bf16.msra.mxu0 0
        %877 = vmatprep.subr.bf16.mxu0 0
        %878 = vmatpush1.bf16.msra.mxu0 0
        %879 = vmatprep.subr.bf16.mxu0 0
        %880 = vmatpush1.bf16.msra.mxu0 0
        %881 = vmatprep.subr.bf16.mxu0 0
        %882 = vmatpush1.bf16.msra.mxu0 0
        %883 = vmatprep.subr.bf16.mxu0 0
        %884 = vmatpush1.bf16.msra.mxu0 0
        %885 = vmatprep.subr.bf16.mxu0 0
        %886 = vmatpush1.bf16.msra.mxu0 0
        %887 = vmatprep.subr.bf16.mxu0 0
        %888 = vmatpush1.bf16.msra.mxu0 0
        %889 = vmatprep.subr.bf16.mxu0 0
        %890 = vmatpush1.bf16.msra.mxu0 0
        %891 = vmatprep.mubr.bf16.mxu0 0
        %892 = vmatmul.mubr.bf16.gmra.mrb[0].mxu0 %v857
        %v893 = vpop.f32.mrb[0].mxu0
        %v894 = vadd.f32 0.0, %v893
        %v895 = vpop.f32.mrb[0].mxu0
        %v896 = vpop.f32.mrb[0].mxu0
        %v897 = vpop.f32.mrb[0].mxu0
        %898 = vdwg.mxu0
        %v903 = vunpack.c.l.b16 %v832
        %v904 = vunpack.c.l.b16 %v833
        %v905 = vunpack.c.l.b16 %v834
        %v906 = vunpack.c.l.b16 %v835
        %v907 = vpack.c.b16 %v904, %v903
        %v908 = vpack.c.b16 %v906, %v905
        %911 = vmatprep.subr.bf16.mxu0 0
        %912 = vmatpush1.bf16.msra.mxu0 %v907
        %913 = vmatprep.subr.bf16.mxu0 0
        %914 = vmatpush1.bf16.msra.mxu0 %v908
        %915 = vmatprep.subr.bf16.mxu0 0
        %916 = vmatpush1.bf16.msra.mxu0 0
        %917 = vmatprep.subr.bf16.mxu0 0
        %918 = vmatpush1.bf16.msra.mxu0 0
        %919 = vmatprep.subr.bf16.mxu0 0
        %920 = vmatpush1.bf16.msra.mxu0 0
        %921 = vmatprep.subr.bf16.mxu0 0
        %922 = vmatpush1.bf16.msra.mxu0 0
        %923 = vmatprep.subr.bf16.mxu0 0
        %924 = vmatpush1.bf16.msra.mxu0 0
        %925 = vmatprep.subr.bf16.mxu0 0
        %926 = vmatpush1.bf16.msra.mxu0 0
        %927 = vmatprep.subr.bf16.mxu0 0
        %928 = vmatpush1.bf16.msra.mxu0 0
        %929 = vmatprep.subr.bf16.mxu0 0
        %930 = vmatpush1.bf16.msra.mxu0 0
        %931 = vmatprep.subr.bf16.mxu0 0
        %932 = vmatpush1.bf16.msra.mxu0 0
        %933 = vmatprep.subr.bf16.mxu0 0
        %934 = vmatpush1.bf16.msra.mxu0 0
        %935 = vmatprep.subr.bf16.mxu0 0
        %936 = vmatpush1.bf16.msra.mxu0 0
        %937 = vmatprep.subr.bf16.mxu0 0
        %938 = vmatpush1.bf16.msra.mxu0 0
        %939 = vmatprep.subr.bf16.mxu0 0
        %940 = vmatpush1.bf16.msra.mxu0 0
        %941 = vmatprep.subr.bf16.mxu0 0
        %942 = vmatpush1.bf16.msra.mxu0 0
        %943 = vmatprep.mubr.bf16.mxu0 0
        %944 = vmatmul.mubr.bf16.gmra.mrb[0].mxu0 %v857
        %v945 = vpop.f32.mrb[0].mxu0
        %v946 = vadd.f32 0.0, %v945
        %v947 = vpop.f32.mrb[0].mxu0
        %v948 = vpop.f32.mrb[0].mxu0
        %v949 = vpop.f32.mrb[0].mxu0
        %950 = vdwg.mxu0
        %v955 = vunpack.c.l.b16 %v836
        %v956 = vunpack.c.l.b16 %v837
        %v957 = vunpack.c.l.b16 %v838
        %v958 = vunpack.c.l.b16 %v839
        %v959 = vpack.c.b16 %v956, %v955
        %v960 = vpack.c.b16 %v958, %v957
        %963 = vmatprep.subr.bf16.mxu0 0
        %964 = vmatpush1.bf16.msra.mxu0 %v959
        %965 = vmatprep.subr.bf16.mxu0 0
        %966 = vmatpush1.bf16.msra.mxu0 %v960
        %967 = vmatprep.subr.bf16.mxu0 0
        %968 = vmatpush1.bf16.msra.mxu0 0
        %969 = vmatprep.subr.bf16.mxu0 0
        %970 = vmatpush1.bf16.msra.mxu0 0
        %971 = vmatprep.subr.bf16.mxu0 0
        %972 = vmatpush1.bf16.msra.mxu0 0
        %973 = vmatprep.subr.bf16.mxu0 0
        %974 = vmatpush1.bf16.msra.mxu0 0
        %975 = vmatprep.subr.bf16.mxu0 0
        %976 = vmatpush1.bf16.msra.mxu0 0
        %977 = vmatprep.subr.bf16.mxu0 0
        %978 = vmatpush1.bf16.msra.mxu0 0
        %979 = vmatprep.subr.bf16.mxu0 0
        %980 = vmatpush1.bf16.msra.mxu0 0
        %981 = vmatprep.subr.bf16.mxu0 0
        %982 = vmatpush1.bf16.msra.mxu0 0
        %983 = vmatprep.subr.bf16.mxu0 0
        %984 = vmatpush1.bf16.msra.mxu0 0
        %985 = vmatprep.subr.bf16.mxu0 0
        %986 = vmatpush1.bf16.msra.mxu0 0
        %987 = vmatprep.subr.bf16.mxu0 0
        %988 = vmatpush1.bf16.msra.mxu0 0
        %989 = vmatprep.subr.bf16.mxu0 0
        %990 = vmatpush1.bf16.msra.mxu0 0
        %991 = vmatprep.subr.bf16.mxu0 0
        %992 = vmatpush1.bf16.msra.mxu0 0
        %993 = vmatprep.subr.bf16.mxu0 0
        %994 = vmatpush1.bf16.msra.mxu0 0
        %995 = vmatprep.mubr.bf16.mxu0 0
        %996 = vmatmul.mubr.bf16.gmra.mrb[0].mxu0 %v857
        %v997 = vpop.f32.mrb[0].mxu0
        %v998 = vadd.f32 0.0, %v997
        %v999 = vpop.f32.mrb[0].mxu0
        %v1000 = vpop.f32.mrb[0].mxu0
        %v1001 = vpop.f32.mrb[0].mxu0
        %1002 = vdwg.mxu0
        %v1007 = vunpack.c.l.b16 %v840
        %v1008 = vunpack.c.l.b16 %v841
        %v1009 = vunpack.c.l.b16 %v842
        %v1010 = vunpack.c.l.b16 %v843
        %v1011 = vpack.c.b16 %v1008, %v1007
        %v1012 = vpack.c.b16 %v1010, %v1009
        %1015 = vmatprep.subr.bf16.mxu0 0
        %1016 = vmatpush1.bf16.msra.mxu0 %v1011
        %1017 = vmatprep.subr.bf16.mxu0 0
        %1018 = vmatpush1.bf16.msra.mxu0 %v1012
        %1019 = vmatprep.subr.bf16.mxu0 0
        %1020 = vmatpush1.bf16.msra.mxu0 0
        %1021 = vmatprep.subr.bf16.mxu0 0
        %1022 = vmatpush1.bf16.msra.mxu0 0
        %1023 = vmatprep.subr.bf16.mxu0 0
        %1024 = vmatpush1.bf16.msra.mxu0 0
        %1025 = vmatprep.subr.bf16.mxu0 0
        %1026 = vmatpush1.bf16.msra.mxu0 0
        %1027 = vmatprep.subr.bf16.mxu0 0
        %1028 = vmatpush1.bf16.msra.mxu0 0
        %1029 = vmatprep.subr.bf16.mxu0 0
        %1030 = vmatpush1.bf16.msra.mxu0 0
        %1031 = vmatprep.subr.bf16.mxu0 0
        %1032 = vmatpush1.bf16.msra.mxu0 0
        %1033 = vmatprep.subr.bf16.mxu0 0
        %1034 = vmatpush1.bf16.msra.mxu0 0
        %1035 = vmatprep.subr.bf16.mxu0 0
        %1036 = vmatpush1.bf16.msra.mxu0 0
        %1037 = vmatprep.subr.bf16.mxu0 0
        %1038 = vmatpush1.bf16.msra.mxu0 0
        %1039 = vmatprep.subr.bf16.mxu0 0
        %1040 = vmatpush1.bf16.msra.mxu0 0
        %1041 = vmatprep.subr.bf16.mxu0 0
        %1042 = vmatpush1.bf16.msra.mxu0 0
        %1043 = vmatprep.subr.bf16.mxu0 0
        %1044 = vmatpush1.bf16.msra.mxu0 0
        %1045 = vmatprep.subr.bf16.mxu0 0
        %1046 = vmatpush1.bf16.msra.mxu0 0
        %1047 = vmatprep.mubr.bf16.mxu0 0
        %1048 = vmatmul.mubr.bf16.gmra.mrb[0].mxu0 %v857
        %v1049 = vpop.f32.mrb[0].mxu0
        %v1050 = vadd.f32 0.0, %v1049
        %v1051 = vpop.f32.mrb[0].mxu0
        %v1052 = vpop.f32.mrb[0].mxu0
        %v1053 = vpop.f32.mrb[0].mxu0
        %1054 = vdwg.mxu0
        %v1055 = vld [vmem:[%s7] sm:$0xf]
        %v1056 = vld [vmem:[%s7 + $0x4] sm:$0xf]
        %v1057 = vld [vmem:[%s7 + $0x8] sm:$0xf]
        %v1058 = vld [vmem:[%s7 + $0xc] sm:$0xf]
        %v1059 = vld [vmem:[%s7 + $0x10] sm:$0xf]
        %v1060 = vld [vmem:[%s7 + $0x14] sm:$0xf]
        %v1061 = vld [vmem:[%s7 + $0x18] sm:$0xf]
        %v1062 = vld [vmem:[%s7 + $0x1c] sm:$0xf]
        %v1063 = vld [vmem:[%s7 + $0x20] sm:$0xf]
        %v1064 = vld [vmem:[%s7 + $0x24] sm:$0xf]
        %v1065 = vld [vmem:[%s7 + $0x28] sm:$0xf]
        %v1066 = vld [vmem:[%s7 + $0x2c] sm:$0xf]
        %v1067 = vld [vmem:[%s7 + $0x30] sm:$0xf]
        %v1068 = vld [vmem:[%s7 + $0x34] sm:$0xf]
        %v1069 = vld [vmem:[%s7 + $0x38] sm:$0xf]
        %v1070 = vld [vmem:[%s7 + $0x3c] sm:$0xf]
        %v1075 = vunpack.c.l.b16 %v1055
        %v1076 = vunpack.c.l.b16 %v1056
        %v1077 = vunpack.c.l.b16 %v1057
        %v1078 = vunpack.c.l.b16 %v1058
        %v1079 = vpack.c.b16 %v1076, %v1075
        %v1080 = vpack.c.b16 %v1078, %v1077
        %1083 = vmatprep.subr.bf16.mxu0 0
        %1084 = vmatpush1.bf16.msra.mxu0 %v1079
        %1085 = vmatprep.subr.bf16.mxu0 0
        %1086 = vmatpush1.bf16.msra.mxu0 %v1080
        %1087 = vmatprep.subr.bf16.mxu0 0
        %1088 = vmatpush1.bf16.msra.mxu0 0
        %1089 = vmatprep.subr.bf16.mxu0 0
        %1090 = vmatpush1.bf16.msra.mxu0 0
        %1091 = vmatprep.subr.bf16.mxu0 0
        %1092 = vmatpush1.bf16.msra.mxu0 0
        %1093 = vmatprep.subr.bf16.mxu0 0
        %1094 = vmatpush1.bf16.msra.mxu0 0
        %1095 = vmatprep.subr.bf16.mxu0 0
        %1096 = vmatpush1.bf16.msra.mxu0 0
        %1097 = vmatprep.subr.bf16.mxu0 0
        %1098 = vmatpush1.bf16.msra.mxu0 0
        %1099 = vmatprep.subr.bf16.mxu0 0
        %1100 = vmatpush1.bf16.msra.mxu0 0
        %1101 = vmatprep.subr.bf16.mxu0 0
        %1102 = vmatpush1.bf16.msra.mxu0 0
        %1103 = vmatprep.subr.bf16.mxu0 0
        %1104 = vmatpush1.bf16.msra.mxu0 0
        %1105 = vmatprep.subr.bf16.mxu0 0
        %1106 = vmatpush1.bf16.msra.mxu0 0
        %1107 = vmatprep.subr.bf16.mxu0 0
        %1108 = vmatpush1.bf16.msra.mxu0 0
        %1109 = vmatprep.subr.bf16.mxu0 0
        %1110 = vmatpush1.bf16.msra.mxu0 0
        %1111 = vmatprep.subr.bf16.mxu0 0
        %1112 = vmatpush1.bf16.msra.mxu0 0
        %1113 = vmatprep.subr.bf16.mxu0 0
        %1114 = vmatpush1.bf16.msra.mxu0 0
        %1115 = vmatprep.mubr.bf16.mxu0 0
        %1116 = vmatmul.mubr.bf16.gmra.mrb[0].mxu0 %v857
        %v1117 = vpop.f32.mrb[0].mxu0
        %v1118 = vadd.f32 0.0, %v1117
        %v1119 = vpop.f32.mrb[0].mxu0
        %v1120 = vpop.f32.mrb[0].mxu0
        %v1121 = vpop.f32.mrb[0].mxu0
        %1122 = vdwg.mxu0
        %v1127 = vunpack.c.l.b16 %v1059
        %v1128 = vunpack.c.l.b16 %v1060
        %v1129 = vunpack.c.l.b16 %v1061
        %v1130 = vunpack.c.l.b16 %v1062
        %v1131 = vpack.c.b16 %v1128, %v1127
        %v1132 = vpack.c.b16 %v1130, %v1129
        %1135 = vmatprep.subr.bf16.mxu0 0
        %1136 = vmatpush1.bf16.msra.mxu0 %v1131
        %1137 = vmatprep.subr.bf16.mxu0 0
        %1138 = vmatpush1.bf16.msra.mxu0 %v1132
        %1139 = vmatprep.subr.bf16.mxu0 0
        %1140 = vmatpush1.bf16.msra.mxu0 0
        %1141 = vmatprep.subr.bf16.mxu0 0
        %1142 = vmatpush1.bf16.msra.mxu0 0
        %1143 = vmatprep.subr.bf16.mxu0 0
        %1144 = vmatpush1.bf16.msra.mxu0 0
        %1145 = vmatprep.subr.bf16.mxu0 0
        %1146 = vmatpush1.bf16.msra.mxu0 0
        %1147 = vmatprep.subr.bf16.mxu0 0
        %1148 = vmatpush1.bf16.msra.mxu0 0
        %1149 = vmatprep.subr.bf16.mxu0 0
        %1150 = vmatpush1.bf16.msra.mxu0 0
        %1151 = vmatprep.subr.bf16.mxu0 0
        %1152 = vmatpush1.bf16.msra.mxu0 0
        %1153 = vmatprep.subr.bf16.mxu0 0
        %1154 = vmatpush1.bf16.msra.mxu0 0
        %1155 = vmatprep.subr.bf16.mxu0 0
        %1156 = vmatpush1.bf16.msra.mxu0 0
        %1157 = vmatprep.subr.bf16.mxu0 0
        %1158 = vmatpush1.bf16.msra.mxu0 0
        %1159 = vmatprep.subr.bf16.mxu0 0
        %1160 = vmatpush1.bf16.msra.mxu0 0
        %1161 = vmatprep.subr.bf16.mxu0 0
        %1162 = vmatpush1.bf16.msra.mxu0 0
        %1163 = vmatprep.subr.bf16.mxu0 0
        %1164 = vmatpush1.bf16.msra.mxu0 0
        %1165 = vmatprep.subr.bf16.mxu0 0
        %1166 = vmatpush1.bf16.msra.mxu0 0
        %1167 = vmatprep.mubr.bf16.mxu0 0
        %1168 = vmatmul.mubr.bf16.gmra.mrb[0].mxu0 %v857
        %v1169 = vpop.f32.mrb[0].mxu0
        %v1170 = vadd.f32 0.0, %v1169
        %v1171 = vpop.f32.mrb[0].mxu0
        %v1172 = vpop.f32.mrb[0].mxu0
        %v1173 = vpop.f32.mrb[0].mxu0
        %1174 = vdwg.mxu0
        %v1179 = vunpack.c.l.b16 %v1063
        %v1180 = vunpack.c.l.b16 %v1064
        %v1181 = vunpack.c.l.b16 %v1065
        %v1182 = vunpack.c.l.b16 %v1066
        %v1183 = vpack.c.b16 %v1180, %v1179
        %v1184 = vpack.c.b16 %v1182, %v1181
        %1187 = vmatprep.subr.bf16.mxu0 0
        %1188 = vmatpush1.bf16.msra.mxu0 %v1183
        %1189 = vmatprep.subr.bf16.mxu0 0
        %1190 = vmatpush1.bf16.msra.mxu0 %v1184
        %1191 = vmatprep.subr.bf16.mxu0 0
        %1192 = vmatpush1.bf16.msra.mxu0 0
        %1193 = vmatprep.subr.bf16.mxu0 0
        %1194 = vmatpush1.bf16.msra.mxu0 0
        %1195 = vmatprep.subr.bf16.mxu0 0
        %1196 = vmatpush1.bf16.msra.mxu0 0
        %1197 = vmatprep.subr.bf16.mxu0 0
        %1198 = vmatpush1.bf16.msra.mxu0 0
        %1199 = vmatprep.subr.bf16.mxu0 0
        %1200 = vmatpush1.bf16.msra.mxu0 0
        %1201 = vmatprep.subr.bf16.mxu0 0
        %1202 = vmatpush1.bf16.msra.mxu0 0
        %1203 = vmatprep.subr.bf16.mxu0 0
        %1204 = vmatpush1.bf16.msra.mxu0 0
        %1205 = vmatprep.subr.bf16.mxu0 0
        %1206 = vmatpush1.bf16.msra.mxu0 0
        %1207 = vmatprep.subr.bf16.mxu0 0
        %1208 = vmatpush1.bf16.msra.mxu0 0
        %1209 = vmatprep.subr.bf16.mxu0 0
        %1210 = vmatpush1.bf16.msra.mxu0 0
        %1211 = vmatprep.subr.bf16.mxu0 0
        %1212 = vmatpush1.bf16.msra.mxu0 0
        %1213 = vmatprep.subr.bf16.mxu0 0
        %1214 = vmatpush1.bf16.msra.mxu0 0
        %1215 = vmatprep.subr.bf16.mxu0 0
        %1216 = vmatpush1.bf16.msra.mxu0 0
        %1217 = vmatprep.subr.bf16.mxu0 0
        %1218 = vmatpush1.bf16.msra.mxu0 0
        %1219 = vmatprep.mubr.bf16.mxu0 0
        %1220 = vmatmul.mubr.bf16.gmra.mrb[0].mxu0 %v857
        %v1221 = vpop.f32.mrb[0].mxu0
        %v1222 = vadd.f32 0.0, %v1221
        %v1223 = vpop.f32.mrb[0].mxu0
        %v1224 = vpop.f32.mrb[0].mxu0
        %v1225 = vpop.f32.mrb[0].mxu0
        %1226 = vdwg.mxu0
        %v1231 = vunpack.c.l.b16 %v1067
        %v1232 = vunpack.c.l.b16 %v1068
        %v1233 = vunpack.c.l.b16 %v1069
        %v1234 = vunpack.c.l.b16 %v1070
        %v1235 = vpack.c.b16 %v1232, %v1231
        %v1236 = vpack.c.b16 %v1234, %v1233
        %1239 = vmatprep.subr.bf16.mxu0 0
        %1240 = vmatpush1.bf16.msra.mxu0 %v1235
        %1241 = vmatprep.subr.bf16.mxu0 0
        %1242 = vmatpush1.bf16.msra.mxu0 %v1236
        %1243 = vmatprep.subr.bf16.mxu0 0
        %1244 = vmatpush1.bf16.msra.mxu0 0
        %1245 = vmatprep.subr.bf16.mxu0 0
        %1246 = vmatpush1.bf16.msra.mxu0 0
        %1247 = vmatprep.subr.bf16.mxu0 0
        %1248 = vmatpush1.bf16.msra.mxu0 0
        %1249 = vmatprep.subr.bf16.mxu0 0
        %1250 = vmatpush1.bf16.msra.mxu0 0
        %1251 = vmatprep.subr.bf16.mxu0 0
        %1252 = vmatpush1.bf16.msra.mxu0 0
        %1253 = vmatprep.subr.bf16.mxu0 0
        %1254 = vmatpush1.bf16.msra.mxu0 0
        %1255 = vmatprep.subr.bf16.mxu0 0
        %1256 = vmatpush1.bf16.msra.mxu0 0
        %1257 = vmatprep.subr.bf16.mxu0 0
        %1258 = vmatpush1.bf16.msra.mxu0 0
        %1259 = vmatprep.subr.bf16.mxu0 0
        %1260 = vmatpush1.bf16.msra.mxu0 0
        %1261 = vmatprep.subr.bf16.mxu0 0
        %1262 = vmatpush1.bf16.msra.mxu0 0
        %1263 = vmatprep.subr.bf16.mxu0 0
        %1264 = vmatpush1.bf16.msra.mxu0 0
        %1265 = vmatprep.subr.bf16.mxu0 0
        %1266 = vmatpush1.bf16.msra.mxu0 0
        %1267 = vmatprep.subr.bf16.mxu0 0
        %1268 = vmatpush1.bf16.msra.mxu0 0
        %1269 = vmatprep.subr.bf16.mxu0 0
        %1270 = vmatpush1.bf16.msra.mxu0 0
        %1271 = vmatprep.mubr.bf16.mxu0 0
        %1272 = vmatmul.mubr.bf16.gmra.mrb[0].mxu0 %v857
        %v1273 = vpop.f32.mrb[0].mxu0
        %v1274 = vadd.f32 0.0, %v1273
        %v1275 = vpop.f32.mrb[0].mxu0
        %v1276 = vpop.f32.mrb[0].mxu0
        %v1277 = vpop.f32.mrb[0].mxu0
        %1278 = vdwg.mxu0
        %v1279 = vpack.c.bf16 %v824, %v824
        %v1280 = vpack.c.bf16 %v825, %v825
        %v1281 = vpack.c.bf16 %v826, %v826
        %v1282 = vpack.c.bf16 %v827, %v827
        %v1283 = vpack.c.bf16 %v894, %v894
        %v1284 = vpack.c.bf16 %v946, %v946
        %v1285 = vpack.c.bf16 %v998, %v998
        %v1286 = vpack.c.bf16 %v1050, %v1050
        %v1287 = vld [vmem:[%s545] sm:$0x1]
        %v1289 = vlaneseq
        %v1290 = vshrl.u32 %v1289, 7
        %v1291 = vsub.s32 0, %v1290
        %v1292 = vrot.slane %v1287, %v1291
        %vm1294 = vcmask 64512
        %v1296 = vsel %vm1294, %v1279, 0
        %v1299 = vsel %vm1294, %v1283, 0
        %1301 = vmatprep.subr.bf16.mxu0 0
        %1302 = vmatpush1.bf16.xpose.msra.mxu0 %v1299
        %1303 = vmatprep.subr.bf16.mxu0 0
        %1304 = vmatpush1.bf16.xpose.msra.mxu0 0
        %1305 = vmatprep.subr.bf16.mxu0 0
        %1306 = vmatpush1.bf16.xpose.msra.mxu0 0
        %1307 = vmatprep.subr.bf16.mxu0 0
        %1308 = vmatpush1.bf16.xpose.msra.mxu0 0
        %1309 = vmatprep.subr.bf16.mxu0 0
        %1310 = vmatpush1.bf16.xpose.msra.mxu0 0
        %1311 = vmatprep.subr.bf16.mxu0 0
        %1312 = vmatpush1.bf16.xpose.msra.mxu0 0
        %1313 = vmatprep.subr.bf16.mxu0 0
        %1314 = vmatpush1.bf16.xpose.msra.mxu0 0
        %1315 = vmatprep.subr.bf16.mxu0 0
        %1316 = vmatpush1.bf16.xpose.msra.mxu0 0
        %1317 = vmatprep.subr.bf16.mxu0 0
        %1318 = vmatpush1.bf16.xpose.msra.mxu0 0
        %1319 = vmatprep.subr.bf16.mxu0 0
        %1320 = vmatpush1.bf16.xpose.msra.mxu0 0
        %1321 = vmatprep.subr.bf16.mxu0 0
        %1322 = vmatpush1.bf16.xpose.msra.mxu0 0
        %1323 = vmatprep.subr.bf16.mxu0 0
        %1324 = vmatpush1.bf16.xpose.msra.mxu0 0
        %1325 = vmatprep.subr.bf16.mxu0 0
        %1326 = vmatpush1.bf16.xpose.msra.mxu0 0
        %1327 = vmatprep.subr.bf16.mxu0 0
        %1328 = vmatpush1.bf16.xpose.msra.mxu0 0
        %1329 = vmatprep.subr.bf16.mxu0 0
        %1330 = vmatpush1.bf16.xpose.msra.mxu0 0
        %1331 = vmatprep.subr.bf16.mxu0 0
        %1332 = vmatpush1.bf16.xpose.msra.mxu0 0
        %1333 = vmatprep.mubr.bf16.mxu0 0
        %1334 = vmatmul.mubr.bf16.gmra.mrb[0].mxu0 %v1296
        %v1335 = vpop.f32.mrb[0].mxu0
        %v1336 = vadd.f32 %v1292, %v1335
        %v1337 = vpop.f32.mrb[0].mxu0
        %v1338 = vpop.f32.mrb[0].mxu0
        %v1339 = vpop.f32.mrb[0].mxu0
        %1340 = vdwg.mxu0
        %v1342 = vsel %vm1294, %v1280, 0
        %v1345 = vsel %vm1294, %v1284, 0
        %1347 = vmatprep.subr.bf16.mxu0 0
        %1348 = vmatpush1.bf16.xpose.msra.mxu0 %v1345
        %1349 = vmatprep.subr.bf16.mxu0 0
        %1350 = vmatpush1.bf16.xpose.msra.mxu0 0
        %1351 = vmatprep.subr.bf16.mxu0 0
        %1352 = vmatpush1.bf16.xpose.msra.mxu0 0
        %1353 = vmatprep.subr.bf16.mxu0 0
        %1354 = vmatpush1.bf16.xpose.msra.mxu0 0
        %1355 = vmatprep.subr.bf16.mxu0 0
        %1356 = vmatpush1.bf16.xpose.msra.mxu0 0
        %1357 = vmatprep.subr.bf16.mxu0 0
        %1358 = vmatpush1.bf16.xpose.msra.mxu0 0
        %1359 = vmatprep.subr.bf16.mxu0 0
        %1360 = vmatpush1.bf16.xpose.msra.mxu0 0
        %1361 = vmatprep.subr.bf16.mxu0 0
        %1362 = vmatpush1.bf16.xpose.msra.mxu0 0
        %1363 = vmatprep.subr.bf16.mxu0 0
        %1364 = vmatpush1.bf16.xpose.msra.mxu0 0
        %1365 = vmatprep.subr.bf16.mxu0 0
        %1366 = vmatpush1.bf16.xpose.msra.mxu0 0
        %1367 = vmatprep.subr.bf16.mxu0 0
        %1368 = vmatpush1.bf16.xpose.msra.mxu0 0
        %1369 = vmatprep.subr.bf16.mxu0 0
        %1370 = vmatpush1.bf16.xpose.msra.mxu0 0
        %1371 = vmatprep.subr.bf16.mxu0 0
        %1372 = vmatpush1.bf16.xpose.msra.mxu0 0
        %1373 = vmatprep.subr.bf16.mxu0 0
        %1374 = vmatpush1.bf16.xpose.msra.mxu0 0
        %1375 = vmatprep.subr.bf16.mxu0 0
        %1376 = vmatpush1.bf16.xpose.msra.mxu0 0
        %1377 = vmatprep.subr.bf16.mxu0 0
        %1378 = vmatpush1.bf16.xpose.msra.mxu0 0
        %1379 = vmatprep.mubr.bf16.mxu0 0
        %1380 = vmatmul.mubr.bf16.gmra.mrb[0].mxu0 %v1342
        %v1381 = vpop.f32.mrb[0].mxu0
        %v1382 = vadd.f32 %v1292, %v1381
        %v1383 = vpop.f32.mrb[0].mxu0
        %v1384 = vpop.f32.mrb[0].mxu0
        %v1385 = vpop.f32.mrb[0].mxu0
        %1386 = vdwg.mxu0
        %v1388 = vsel %vm1294, %v1281, 0
        %v1391 = vsel %vm1294, %v1285, 0
        %1393 = vmatprep.subr.bf16.mxu0 0
        %1394 = vmatpush1.bf16.xpose.msra.mxu0 %v1391
        %1395 = vmatprep.subr.bf16.mxu0 0
        %1396 = vmatpush1.bf16.xpose.msra.mxu0 0
        %1397 = vmatprep.subr.bf16.mxu0 0
        %1398 = vmatpush1.bf16.xpose.msra.mxu0 0
        %1399 = vmatprep.subr.bf16.mxu0 0
        %1400 = vmatpush1.bf16.xpose.msra.mxu0 0
        %1401 = vmatprep.subr.bf16.mxu0 0
        %1402 = vmatpush1.bf16.xpose.msra.mxu0 0
        %1403 = vmatprep.subr.bf16.mxu0 0
        %1404 = vmatpush1.bf16.xpose.msra.mxu0 0
        %1405 = vmatprep.subr.bf16.mxu0 0
        %1406 = vmatpush1.bf16.xpose.msra.mxu0 0
        %1407 = vmatprep.subr.bf16.mxu0 0
        %1408 = vmatpush1.bf16.xpose.msra.mxu0 0
        %1409 = vmatprep.subr.bf16.mxu0 0
        %1410 = vmatpush1.bf16.xpose.msra.mxu0 0
        %1411 = vmatprep.subr.bf16.mxu0 0
        %1412 = vmatpush1.bf16.xpose.msra.mxu0 0
        %1413 = vmatprep.subr.bf16.mxu0 0
        %1414 = vmatpush1.bf16.xpose.msra.mxu0 0
        %1415 = vmatprep.subr.bf16.mxu0 0
        %1416 = vmatpush1.bf16.xpose.msra.mxu0 0
        %1417 = vmatprep.subr.bf16.mxu0 0
        %1418 = vmatpush1.bf16.xpose.msra.mxu0 0
        %1419 = vmatprep.subr.bf16.mxu0 0
        %1420 = vmatpush1.bf16.xpose.msra.mxu0 0
        %1421 = vmatprep.subr.bf16.mxu0 0
        %1422 = vmatpush1.bf16.xpose.msra.mxu0 0
        %1423 = vmatprep.subr.bf16.mxu0 0
        %1424 = vmatpush1.bf16.xpose.msra.mxu0 0
        %1425 = vmatprep.mubr.bf16.mxu0 0
        %1426 = vmatmul.mubr.bf16.gmra.mrb[0].mxu0 %v1388
        %v1427 = vpop.f32.mrb[0].mxu0
        %v1428 = vadd.f32 %v1292, %v1427
        %v1429 = vpop.f32.mrb[0].mxu0
        %v1430 = vpop.f32.mrb[0].mxu0
        %v1431 = vpop.f32.mrb[0].mxu0
        %1432 = vdwg.mxu0
        %v1434 = vsel %vm1294, %v1282, 0
        %v1437 = vsel %vm1294, %v1286, 0
        %1439 = vmatprep.subr.bf16.mxu0 0
        %1440 = vmatpush1.bf16.xpose.msra.mxu0 %v1437
        %1441 = vmatprep.subr.bf16.mxu0 0
        %1442 = vmatpush1.bf16.xpose.msra.mxu0 0
        %1443 = vmatprep.subr.bf16.mxu0 0
        %1444 = vmatpush1.bf16.xpose.msra.mxu0 0
        %1445 = vmatprep.subr.bf16.mxu0 0
        %1446 = vmatpush1.bf16.xpose.msra.mxu0 0
        %1447 = vmatprep.subr.bf16.mxu0 0
        %1448 = vmatpush1.bf16.xpose.msra.mxu0 0
        %1449 = vmatprep.subr.bf16.mxu0 0
        %1450 = vmatpush1.bf16.xpose.msra.mxu0 0
        %1451 = vmatprep.subr.bf16.mxu0 0
        %1452 = vmatpush1.bf16.xpose.msra.mxu0 0
        %1453 = vmatprep.subr.bf16.mxu0 0
        %1454 = vmatpush1.bf16.xpose.msra.mxu0 0
        %1455 = vmatprep.subr.bf16.mxu0 0
        %1456 = vmatpush1.bf16.xpose.msra.mxu0 0
        %1457 = vmatprep.subr.bf16.mxu0 0
        %1458 = vmatpush1.bf16.xpose.msra.mxu0 0
        %1459 = vmatprep.subr.bf16.mxu0 0
        %1460 = vmatpush1.bf16.xpose.msra.mxu0 0
        %1461 = vmatprep.subr.bf16.mxu0 0
        %1462 = vmatpush1.bf16.xpose.msra.mxu0 0
        %1463 = vmatprep.subr.bf16.mxu0 0
        %1464 = vmatpush1.bf16.xpose.msra.mxu0 0
        %1465 = vmatprep.subr.bf16.mxu0 0
        %1466 = vmatpush1.bf16.xpose.msra.mxu0 0
        %1467 = vmatprep.subr.bf16.mxu0 0
        %1468 = vmatpush1.bf16.xpose.msra.mxu0 0
        %1469 = vmatprep.subr.bf16.mxu0 0
        %1470 = vmatpush1.bf16.xpose.msra.mxu0 0
        %1471 = vmatprep.mubr.bf16.mxu0 0
        %1472 = vmatmul.mubr.bf16.gmra.mrb[0].mxu0 %v1434
        %v1473 = vpop.f32.mrb[0].mxu0
        %v1474 = vadd.f32 %v1292, %v1473
        %v1475 = vpop.f32.mrb[0].mxu0
        %v1476 = vpop.f32.mrb[0].mxu0
        %v1477 = vpop.f32.mrb[0].mxu0
        %1478 = vdwg.mxu0
        %v1479 = vsel %vm1294, %v1336, -inf
        %1480 = vmax.xlane.f32.xlu0 %v1479
        %v1481 = vpop.xlane.xlu0 %1480
        %v1482 = vsel %vm1294, %v1382, -inf
        %1483 = vmax.xlane.f32.xlu0 %v1482
        %v1484 = vpop.xlane.xlu0 %1483
        %v1485 = vsel %vm1294, %v1428, -inf
        %1486 = vmax.xlane.f32.xlu0 %v1485
        %v1487 = vpop.xlane.xlu0 %1486
        %v1488 = vsel %vm1294, %v1474, -inf
        %1489 = vmax.xlane.f32.xlu0 %v1488
        %v1490 = vpop.xlane.xlu0 %1489
        %v1491 = vsub.f32 %v1336, %v1481
        %v1492 = vsub.f32 %v1382, %v1484
        %v1493 = vsub.f32 %v1428, %v1487
        %v1494 = vsub.f32 %v1474, %v1490
        %v1495 = vmul.f32 %v1491, 1.442695
        %v1496 = vpow.pop %v1495
        %v1497 = vmul.f32 %v1492, 1.442695
        %v1498 = vpow.pop %v1497
        %v1499 = vmul.f32 %v1493, 1.442695
        %v1500 = vpow.pop %v1499
        %v1501 = vmul.f32 %v1494, 1.442695
        %v1502 = vpow.pop %v1501
        %v1503 = vsel %vm1294, %v1496, 0.0
        %1504 = vadd.xlane.f32.xlu0 %v1503
        %v1505 = vpop.xlane.xlu0 %1504
        %v1506 = vsel %vm1294, %v1498, 0.0
        %1507 = vadd.xlane.f32.xlu0 %v1506
        %v1508 = vpop.xlane.xlu0 %1507
        %v1509 = vsel %vm1294, %v1500, 0.0
        %1510 = vadd.xlane.f32.xlu0 %v1509
        %v1511 = vpop.xlane.xlu0 %1510
        %v1512 = vsel %vm1294, %v1502, 0.0
        %1513 = vadd.xlane.f32.xlu0 %v1512
        %v1514 = vpop.xlane.xlu0 %1513
        %v1515 = vrcp.pop %v1505
        %v1516 = vrcp.pop %v1508
        %v1517 = vrcp.pop %v1511
        %v1518 = vrcp.pop %v1514
        %v1519 = vmul.f32 %v1496, %v1515
        %v1520 = vmul.f32 %v1498, %v1516
        %v1521 = vmul.f32 %v1500, %v1517
        %v1522 = vmul.f32 %v1502, %v1518
        %v1523 = vpack.c.bf16 %v1519, %v1519
        %v1524 = vpack.c.bf16 %v1520, %v1520
        %v1525 = vpack.c.bf16 %v1521, %v1521
        %v1526 = vpack.c.bf16 %v1522, %v1522
        %v1527 = vpack.c.bf16 %v1118, %v1118
        %v1528 = vpack.c.bf16 %v1170, %v1170
        %v1529 = vpack.c.bf16 %v1222, %v1222
        %v1530 = vpack.c.bf16 %v1274, %v1274
        %v1532 = vsel %vm1294, %v1523, 0
        %vm1534 = vcmask 1043456
        %v1536 = vsel %vm1534, %v1527, 0
        %1538 = vmatprep.subr.bf16.mxu0 0
        %1539 = vmatpush1.bf16.msra.mxu0 %v1536
        %1540 = vmatprep.subr.bf16.mxu0 0
        %1541 = vmatpush1.bf16.msra.mxu0 0
        %1542 = vmatprep.subr.bf16.mxu0 0
        %1543 = vmatpush1.bf16.msra.mxu0 0
        %1544 = vmatprep.subr.bf16.mxu0 0
        %1545 = vmatpush1.bf16.msra.mxu0 0
        %1546 = vmatprep.subr.bf16.mxu0 0
        %1547 = vmatpush1.bf16.msra.mxu0 0
        %1548 = vmatprep.subr.bf16.mxu0 0
        %1549 = vmatpush1.bf16.msra.mxu0 0
        %1550 = vmatprep.subr.bf16.mxu0 0
        %1551 = vmatpush1.bf16.msra.mxu0 0
        %1552 = vmatprep.subr.bf16.mxu0 0
        %1553 = vmatpush1.bf16.msra.mxu0 0
        %1554 = vmatprep.subr.bf16.mxu0 0
        %1555 = vmatpush1.bf16.msra.mxu0 0
        %1556 = vmatprep.subr.bf16.mxu0 0
        %1557 = vmatpush1.bf16.msra.mxu0 0
        %1558 = vmatprep.subr.bf16.mxu0 0
        %1559 = vmatpush1.bf16.msra.mxu0 0
        %1560 = vmatprep.subr.bf16.mxu0 0
        %1561 = vmatpush1.bf16.msra.mxu0 0
        %1562 = vmatprep.subr.bf16.mxu0 0
        %1563 = vmatpush1.bf16.msra.mxu0 0
        %1564 = vmatprep.subr.bf16.mxu0 0
        %1565 = vmatpush1.bf16.msra.mxu0 0
        %1566 = vmatprep.subr.bf16.mxu0 0
        %1567 = vmatpush1.bf16.msra.mxu0 0
        %1568 = vmatprep.subr.bf16.mxu0 0
        %1569 = vmatpush1.bf16.msra.mxu0 0
        %1570 = vmatprep.mubr.bf16.mxu0 0
        %1571 = vmatmul.mubr.bf16.gmra.mrb[0].mxu0 %v1532
        %v1572 = vpop.f32.mrb[0].mxu0
        %v1573 = vadd.f32 0.0, %v1572
        %v1574 = vpop.f32.mrb[0].mxu0
        %v1575 = vpop.f32.mrb[0].mxu0
        %v1576 = vpop.f32.mrb[0].mxu0
        %1577 = vdwg.mxu0
        %v1579 = vsel %vm1294, %v1524, 0
        %v1582 = vsel %vm1534, %v1528, 0
        %1584 = vmatprep.subr.bf16.mxu0 0
        %1585 = vmatpush1.bf16.msra.mxu0 %v1582
        %1586 = vmatprep.subr.bf16.mxu0 0
        %1587 = vmatpush1.bf16.msra.mxu0 0
        %1588 = vmatprep.subr.bf16.mxu0 0
        %1589 = vmatpush1.bf16.msra.mxu0 0
        %1590 = vmatprep.subr.bf16.mxu0 0
        %1591 = vmatpush1.bf16.msra.mxu0 0
        %1592 = vmatprep.subr.bf16.mxu0 0
        %1593 = vmatpush1.bf16.msra.mxu0 0
        %1594 = vmatprep.subr.bf16.mxu0 0
        %1595 = vmatpush1.bf16.msra.mxu0 0
        %1596 = vmatprep.subr.bf16.mxu0 0
        %1597 = vmatpush1.bf16.msra.mxu0 0
        %1598 = vmatprep.subr.bf16.mxu0 0
        %1599 = vmatpush1.bf16.msra.mxu0 0
        %1600 = vmatprep.subr.bf16.mxu0 0
        %1601 = vmatpush1.bf16.msra.mxu0 0
        %1602 = vmatprep.subr.bf16.mxu0 0
        %1603 = vmatpush1.bf16.msra.mxu0 0
        %1604 = vmatprep.subr.bf16.mxu0 0
        %1605 = vmatpush1.bf16.msra.mxu0 0
        %1606 = vmatprep.subr.bf16.mxu0 0
        %1607 = vmatpush1.bf16.msra.mxu0 0
        %1608 = vmatprep.subr.bf16.mxu0 0
        %1609 = vmatpush1.bf16.msra.mxu0 0
        %1610 = vmatprep.subr.bf16.mxu0 0
        %1611 = vmatpush1.bf16.msra.mxu0 0
        %1612 = vmatprep.subr.bf16.mxu0 0
        %1613 = vmatpush1.bf16.msra.mxu0 0
        %1614 = vmatprep.subr.bf16.mxu0 0
        %1615 = vmatpush1.bf16.msra.mxu0 0
        %1616 = vmatprep.mubr.bf16.mxu0 0
        %1617 = vmatmul.mubr.bf16.gmra.mrb[0].mxu0 %v1579
        %v1618 = vpop.f32.mrb[0].mxu0
        %v1619 = vadd.f32 0.0, %v1618
        %v1620 = vpop.f32.mrb[0].mxu0
        %v1621 = vpop.f32.mrb[0].mxu0
        %v1622 = vpop.f32.mrb[0].mxu0
        %1623 = vdwg.mxu0
        %v1625 = vsel %vm1294, %v1525, 0
        %v1628 = vsel %vm1534, %v1529, 0
        %1630 = vmatprep.subr.bf16.mxu0 0
        %1631 = vmatpush1.bf16.msra.mxu0 %v1628
        %1632 = vmatprep.subr.bf16.mxu0 0
        %1633 = vmatpush1.bf16.msra.mxu0 0
        %1634 = vmatprep.subr.bf16.mxu0 0
        %1635 = vmatpush1.bf16.msra.mxu0 0
        %1636 = vmatprep.subr.bf16.mxu0 0
        %1637 = vmatpush1.bf16.msra.mxu0 0
        %1638 = vmatprep.subr.bf16.mxu0 0
        %1639 = vmatpush1.bf16.msra.mxu0 0
        %1640 = vmatprep.subr.bf16.mxu0 0
        %1641 = vmatpush1.bf16.msra.mxu0 0
        %1642 = vmatprep.subr.bf16.mxu0 0
        %1643 = vmatpush1.bf16.msra.mxu0 0
        %1644 = vmatprep.subr.bf16.mxu0 0
        %1645 = vmatpush1.bf16.msra.mxu0 0
        %1646 = vmatprep.subr.bf16.mxu0 0
        %1647 = vmatpush1.bf16.msra.mxu0 0
        %1648 = vmatprep.subr.bf16.mxu0 0
        %1649 = vmatpush1.bf16.msra.mxu0 0
        %1650 = vmatprep.subr.bf16.mxu0 0
        %1651 = vmatpush1.bf16.msra.mxu0 0
        %1652 = vmatprep.subr.bf16.mxu0 0
        %1653 = vmatpush1.bf16.msra.mxu0 0
        %1654 = vmatprep.subr.bf16.mxu0 0
        %1655 = vmatpush1.bf16.msra.mxu0 0
        %1656 = vmatprep.subr.bf16.mxu0 0
        %1657 = vmatpush1.bf16.msra.mxu0 0
        %1658 = vmatprep.subr.bf16.mxu0 0
        %1659 = vmatpush1.bf16.msra.mxu0 0
        %1660 = vmatprep.subr.bf16.mxu0 0
        %1661 = vmatpush1.bf16.msra.mxu0 0
        %1662 = vmatprep.mubr.bf16.mxu0 0
        %1663 = vmatmul.mubr.bf16.gmra.mrb[0].mxu0 %v1625
        %v1664 = vpop.f32.mrb[0].mxu0
        %v1665 = vadd.f32 0.0, %v1664
        %v1666 = vpop.f32.mrb[0].mxu0
        %v1667 = vpop.f32.mrb[0].mxu0
        %v1668 = vpop.f32.mrb[0].mxu0
        %1669 = vdwg.mxu0
        %v1671 = vsel %vm1294, %v1526, 0
        %v1674 = vsel %vm1534, %v1530, 0
        %1676 = vmatprep.subr.bf16.mxu0 0
        %1677 = vmatpush1.bf16.msra.mxu0 %v1674
        %1678 = vmatprep.subr.bf16.mxu0 0
        %1679 = vmatpush1.bf16.msra.mxu0 0
        %1680 = vmatprep.subr.bf16.mxu0 0
        %1681 = vmatpush1.bf16.msra.mxu0 0
        %1682 = vmatprep.subr.bf16.mxu0 0
        %1683 = vmatpush1.bf16.msra.mxu0 0
        %1684 = vmatprep.subr.bf16.mxu0 0
        %1685 = vmatpush1.bf16.msra.mxu0 0
        %1686 = vmatprep.subr.bf16.mxu0 0
        %1687 = vmatpush1.bf16.msra.mxu0 0
        %1688 = vmatprep.subr.bf16.mxu0 0
        %1689 = vmatpush1.bf16.msra.mxu0 0
        %1690 = vmatprep.subr.bf16.mxu0 0
        %1691 = vmatpush1.bf16.msra.mxu0 0
        %1692 = vmatprep.subr.bf16.mxu0 0
        %1693 = vmatpush1.bf16.msra.mxu0 0
        %1694 = vmatprep.subr.bf16.mxu0 0
        %1695 = vmatpush1.bf16.msra.mxu0 0
        %1696 = vmatprep.subr.bf16.mxu0 0
        %1697 = vmatpush1.bf16.msra.mxu0 0
        %1698 = vmatprep.subr.bf16.mxu0 0
        %1699 = vmatpush1.bf16.msra.mxu0 0
        %1700 = vmatprep.subr.bf16.mxu0 0
        %1701 = vmatpush1.bf16.msra.mxu0 0
        %1702 = vmatprep.subr.bf16.mxu0 0
        %1703 = vmatpush1.bf16.msra.mxu0 0
        %1704 = vmatprep.subr.bf16.mxu0 0
        %1705 = vmatpush1.bf16.msra.mxu0 0
        %1706 = vmatprep.subr.bf16.mxu0 0
        %1707 = vmatpush1.bf16.msra.mxu0 0
        %1708 = vmatprep.mubr.bf16.mxu0 0
        %1709 = vmatmul.mubr.bf16.gmra.mrb[0].mxu0 %v1671
        %v1710 = vpop.f32.mrb[0].mxu0
        %v1711 = vadd.f32 0.0, %v1710
        %v1712 = vpop.f32.mrb[0].mxu0
        %v1713 = vpop.f32.mrb[0].mxu0
        %v1714 = vpop.f32.mrb[0].mxu0
        %1715 = vdwg.mxu0
        %v1716 = vpack.c.bf16 %v1573, %v1573
        %v1717 = vpack.c.bf16 %v1619, %v1619
        %v1718 = vpack.c.bf16 %v1665, %v1665
        %v1719 = vpack.c.bf16 %v1711, %v1711
        %v1720 = vld [vmem:[%s8] sm:$0xf]
        %v1721 = vld [vmem:[%s8 + $0x4] sm:$0xf]
        %v1722 = vld [vmem:[%s8 + $0x8] sm:$0xf]
        %v1723 = vld [vmem:[%s8 + $0xc] sm:$0xf]
        %v1725 = vsel %vm1294, %v1716, 0
        %v1728 = vsel %vm1534, %v1720, 0
        %1730 = vmatprep.subr.bf16.mxu0 0
        %1731 = vmatpush1.bf16.msra.mxu0 %v1728
        %1732 = vmatprep.subr.bf16.mxu0 0
        %1733 = vmatpush1.bf16.msra.mxu0 0
        %1734 = vmatprep.subr.bf16.mxu0 0
        %1735 = vmatpush1.bf16.msra.mxu0 0
        %1736 = vmatprep.subr.bf16.mxu0 0
        %1737 = vmatpush1.bf16.msra.mxu0 0
        %1738 = vmatprep.subr.bf16.mxu0 0
        %1739 = vmatpush1.bf16.msra.mxu0 0
        %1740 = vmatprep.subr.bf16.mxu0 0
        %1741 = vmatpush1.bf16.msra.mxu0 0
        %1742 = vmatprep.subr.bf16.mxu0 0
        %1743 = vmatpush1.bf16.msra.mxu0 0
        %1744 = vmatprep.subr.bf16.mxu0 0
        %1745 = vmatpush1.bf16.msra.mxu0 0
        %1746 = vmatprep.subr.bf16.mxu0 0
        %1747 = vmatpush1.bf16.msra.mxu0 0
        %1748 = vmatprep.subr.bf16.mxu0 0
        %1749 = vmatpush1.bf16.msra.mxu0 0
        %1750 = vmatprep.subr.bf16.mxu0 0
        %1751 = vmatpush1.bf16.msra.mxu0 0
        %1752 = vmatprep.subr.bf16.mxu0 0
        %1753 = vmatpush1.bf16.msra.mxu0 0
        %1754 = vmatprep.subr.bf16.mxu0 0
        %1755 = vmatpush1.bf16.msra.mxu0 0
        %1756 = vmatprep.subr.bf16.mxu0 0
        %1757 = vmatpush1.bf16.msra.mxu0 0
        %1758 = vmatprep.subr.bf16.mxu0 0
        %1759 = vmatpush1.bf16.msra.mxu0 0
        %1760 = vmatprep.subr.bf16.mxu0 0
        %1761 = vmatpush1.bf16.msra.mxu0 0
        %1762 = vmatprep.mubr.bf16.mxu0 0
        %1763 = vmatmul.mubr.bf16.gmra.mrb[0].mxu0 %v1725
        %v1764 = vpop.f32.mrb[0].mxu0
        %v1765 = vadd.f32 0.0, %v1764
        %v1766 = vpop.f32.mrb[0].mxu0
        %v1767 = vpop.f32.mrb[0].mxu0
        %v1768 = vpop.f32.mrb[0].mxu0
        %1769 = vdwg.mxu0
        %v1771 = vsel %vm1294, %v1717, 0
        %v1774 = vsel %vm1534, %v1721, 0
        %1776 = vmatprep.subr.bf16.mxu0 0
        %1777 = vmatpush1.bf16.msra.mxu0 %v1774
        %1778 = vmatprep.subr.bf16.mxu0 0
        %1779 = vmatpush1.bf16.msra.mxu0 0
        %1780 = vmatprep.subr.bf16.mxu0 0
        %1781 = vmatpush1.bf16.msra.mxu0 0
        %1782 = vmatprep.subr.bf16.mxu0 0
        %1783 = vmatpush1.bf16.msra.mxu0 0
        %1784 = vmatprep.subr.bf16.mxu0 0
        %1785 = vmatpush1.bf16.msra.mxu0 0
        %1786 = vmatprep.subr.bf16.mxu0 0
        %1787 = vmatpush1.bf16.msra.mxu0 0
        %1788 = vmatprep.subr.bf16.mxu0 0
        %1789 = vmatpush1.bf16.msra.mxu0 0
        %1790 = vmatprep.subr.bf16.mxu0 0
        %1791 = vmatpush1.bf16.msra.mxu0 0
        %1792 = vmatprep.subr.bf16.mxu0 0
        %1793 = vmatpush1.bf16.msra.mxu0 0
        %1794 = vmatprep.subr.bf16.mxu0 0
        %1795 = vmatpush1.bf16.msra.mxu0 0
        %1796 = vmatprep.subr.bf16.mxu0 0
        %1797 = vmatpush1.bf16.msra.mxu0 0
        %1798 = vmatprep.subr.bf16.mxu0 0
        %1799 = vmatpush1.bf16.msra.mxu0 0
        %1800 = vmatprep.subr.bf16.mxu0 0
        %1801 = vmatpush1.bf16.msra.mxu0 0
        %1802 = vmatprep.subr.bf16.mxu0 0
        %1803 = vmatpush1.bf16.msra.mxu0 0
        %1804 = vmatprep.subr.bf16.mxu0 0
        %1805 = vmatpush1.bf16.msra.mxu0 0
        %1806 = vmatprep.subr.bf16.mxu0 0
        %1807 = vmatpush1.bf16.msra.mxu0 0
        %1808 = vmatprep.mubr.bf16.mxu0 0
        %1809 = vmatmul.mubr.bf16.gmra.mrb[0].mxu0 %v1771
        %v1810 = vpop.f32.mrb[0].mxu0
        %v1811 = vadd.f32 0.0, %v1810
        %v1812 = vpop.f32.mrb[0].mxu0
        %v1813 = vpop.f32.mrb[0].mxu0
        %v1814 = vpop.f32.mrb[0].mxu0
        %1815 = vdwg.mxu0
        %v1817 = vsel %vm1294, %v1718, 0
        %v1820 = vsel %vm1534, %v1722, 0
        %1822 = vmatprep.subr.bf16.mxu0 0
        %1823 = vmatpush1.bf16.msra.mxu0 %v1820
        %1824 = vmatprep.subr.bf16.mxu0 0
        %1825 = vmatpush1.bf16.msra.mxu0 0
        %1826 = vmatprep.subr.bf16.mxu0 0
        %1827 = vmatpush1.bf16.msra.mxu0 0
        %1828 = vmatprep.subr.bf16.mxu0 0
        %1829 = vmatpush1.bf16.msra.mxu0 0
        %1830 = vmatprep.subr.bf16.mxu0 0
        %1831 = vmatpush1.bf16.msra.mxu0 0
        %1832 = vmatprep.subr.bf16.mxu0 0
        %1833 = vmatpush1.bf16.msra.mxu0 0
        %1834 = vmatprep.subr.bf16.mxu0 0
        %1835 = vmatpush1.bf16.msra.mxu0 0
        %1836 = vmatprep.subr.bf16.mxu0 0
        %1837 = vmatpush1.bf16.msra.mxu0 0
        %1838 = vmatprep.subr.bf16.mxu0 0
        %1839 = vmatpush1.bf16.msra.mxu0 0
        %1840 = vmatprep.subr.bf16.mxu0 0
        %1841 = vmatpush1.bf16.msra.mxu0 0
        %1842 = vmatprep.subr.bf16.mxu0 0
        %1843 = vmatpush1.bf16.msra.mxu0 0
        %1844 = vmatprep.subr.bf16.mxu0 0
        %1845 = vmatpush1.bf16.msra.mxu0 0
        %1846 = vmatprep.subr.bf16.mxu0 0
        %1847 = vmatpush1.bf16.msra.mxu0 0
        %1848 = vmatprep.subr.bf16.mxu0 0
        %1849 = vmatpush1.bf16.msra.mxu0 0
        %1850 = vmatprep.subr.bf16.mxu0 0
        %1851 = vmatpush1.bf16.msra.mxu0 0
        %1852 = vmatprep.subr.bf16.mxu0 0
        %1853 = vmatpush1.bf16.msra.mxu0 0
        %1854 = vmatprep.mubr.bf16.mxu0 0
        %1855 = vmatmul.mubr.bf16.gmra.mrb[0].mxu0 %v1817
        %v1856 = vpop.f32.mrb[0].mxu0
        %v1857 = vadd.f32 0.0, %v1856
        %v1858 = vpop.f32.mrb[0].mxu0
        %v1859 = vpop.f32.mrb[0].mxu0
        %v1860 = vpop.f32.mrb[0].mxu0
        %1861 = vdwg.mxu0
        %v1863 = vsel %vm1294, %v1719, 0
        %v1866 = vsel %vm1534, %v1723, 0
        %1868 = vmatprep.subr.bf16.mxu0 0
        %1869 = vmatpush1.bf16.msra.mxu0 %v1866
        %1870 = vmatprep.subr.bf16.mxu0 0
        %1871 = vmatpush1.bf16.msra.mxu0 0
        %1872 = vmatprep.subr.bf16.mxu0 0
        %1873 = vmatpush1.bf16.msra.mxu0 0
        %1874 = vmatprep.subr.bf16.mxu0 0
        %1875 = vmatpush1.bf16.msra.mxu0 0
        %1876 = vmatprep.subr.bf16.mxu0 0
        %1877 = vmatpush1.bf16.msra.mxu0 0
        %1878 = vmatprep.subr.bf16.mxu0 0
        %1879 = vmatpush1.bf16.msra.mxu0 0
        %1880 = vmatprep.subr.bf16.mxu0 0
        %1881 = vmatpush1.bf16.msra.mxu0 0
        %1882 = vmatprep.subr.bf16.mxu0 0
        %1883 = vmatpush1.bf16.msra.mxu0 0
        %1884 = vmatprep.subr.bf16.mxu0 0
        %1885 = vmatpush1.bf16.msra.mxu0 0
        %1886 = vmatprep.subr.bf16.mxu0 0
        %1887 = vmatpush1.bf16.msra.mxu0 0
        %1888 = vmatprep.subr.bf16.mxu0 0
        %1889 = vmatpush1.bf16.msra.mxu0 0
        %1890 = vmatprep.subr.bf16.mxu0 0
        %1891 = vmatpush1.bf16.msra.mxu0 0
        %1892 = vmatprep.subr.bf16.mxu0 0
        %1893 = vmatpush1.bf16.msra.mxu0 0
        %1894 = vmatprep.subr.bf16.mxu0 0
        %1895 = vmatpush1.bf16.msra.mxu0 0
        %1896 = vmatprep.subr.bf16.mxu0 0
        %1897 = vmatpush1.bf16.msra.mxu0 0
        %1898 = vmatprep.subr.bf16.mxu0 0
        %1899 = vmatpush1.bf16.msra.mxu0 0
        %1900 = vmatprep.mubr.bf16.mxu0 0
        %1901 = vmatmul.mubr.bf16.gmra.mrb[0].mxu0 %v1863
        %v1902 = vpop.f32.mrb[0].mxu0
        %v1903 = vadd.f32 0.0, %v1902
        %v1904 = vpop.f32.mrb[0].mxu0
        %v1905 = vpop.f32.mrb[0].mxu0
        %v1906 = vpop.f32.mrb[0].mxu0
        %1907 = vdwg.mxu0
        %v1908 = vsel %vm549, %v1765, 0.0
        %v1909 = vsel %vm549, %v1811, 0.0
        %v1910 = vadd.f32 %v1908, %v1909
        %v1911 = vsel %vm549, %v1857, 0.0
        %v1912 = vadd.f32 %v1910, %v1911
        %v1913 = vsel %vm549, %v1903, 0.0
        %v1914 = vadd.f32 %v1912, %v1913
        %v1915 = vadd.f32 %v1914, %v547
        %v1916 = vsel %vm549, %v1915, 0.0
        %1917 = vadd.xlane.f32.xlu0 %v1916
        %v1918 = vpop.xlane.xlu0 %1917
        %v1919 = vmul.f32 %v1918, %v553
        %v1920 = vsub.f32 %v1915, %v1919
        %v1921 = vmul.f32 %v1920, %v1920
        %v1922 = vsel %vm549, %v1921, 0.0
        %1923 = vadd.xlane.f32.xlu0 %v1922
        %v1924 = vpop.xlane.xlu0 %1923
        %v1925 = vmul.f32 %v1924, %v553
        %v1926 = vadd.f32 %v1925, 1e-05
        %v1927 = vrsqrt.pop %v1926
        %v1928 = vmul.f32 %v1920, %v1927
        %v1929 = vld [vmem:[%s9] sm:$0x1]
        %v1931 = vlaneseq
        %v1932 = vshrl.u32 %v1931, 7
        %v1933 = vsub.s32 0, %v1932
        %v1934 = vrot.slane %v1929, %v1933
        %v1936 = vmul.f32 %v1928, %v1934
        %v1937 = vld [vmem:[%s10] sm:$0x1]
        %v1939 = vlaneseq
        %v1940 = vshrl.u32 %v1939, 7
        %v1941 = vsub.s32 0, %v1940
        %v1942 = vrot.slane %v1937, %v1941
        %v1944 = vadd.f32 %v1936, %v1942
        %v1945 = vpack.c.bf16 %v1944, %v1944
        %v1946 = vld [vmem:[%s11] sm:$0xf]
        %v1947 = vld [vmem:[%s11 + $0x4] sm:$0xf]
        %v1948 = vld [vmem:[%s11 + $0x8] sm:$0xf]
        %v1949 = vld [vmem:[%s11 + $0xc] sm:$0xf]
        %v1950 = vld [vmem:[%s12] sm:$0x1]
        %v1952 = vlaneseq
        %v1953 = vshrl.u32 %v1952, 7
        %v1954 = vsub.s32 0, %v1953
        %v1955 = vrot.slane %v1950, %v1954
        %v1961 = vunpack.c.l.b16 %v1946
        %v1962 = vunpack.c.l.b16 %v1947
        %v1963 = vunpack.c.l.b16 %v1948
        %v1964 = vunpack.c.l.b16 %v1949
        %v1965 = vpack.c.b16 %v1962, %v1961
        %v1966 = vpack.c.b16 %v1964, %v1963
        %v1970 = vsel %vm549, %v1945, 0
        %1972 = vmatprep.subr.bf16.mxu0 0
        %1973 = vmatpush1.bf16.msra.mxu0 %v1965
        %1974 = vmatprep.subr.bf16.mxu0 0
        %1975 = vmatpush1.bf16.msra.mxu0 %v1966
        %1976 = vmatprep.subr.bf16.mxu0 0
        %1977 = vmatpush1.bf16.msra.mxu0 0
        %1978 = vmatprep.subr.bf16.mxu0 0
        %1979 = vmatpush1.bf16.msra.mxu0 0
        %1980 = vmatprep.subr.bf16.mxu0 0
        %1981 = vmatpush1.bf16.msra.mxu0 0
        %1982 = vmatprep.subr.bf16.mxu0 0
        %1983 = vmatpush1.bf16.msra.mxu0 0
        %1984 = vmatprep.subr.bf16.mxu0 0
        %1985 = vmatpush1.bf16.msra.mxu0 0
        %1986 = vmatprep.subr.bf16.mxu0 0
        %1987 = vmatpush1.bf16.msra.mxu0 0
        %1988 = vmatprep.subr.bf16.mxu0 0
        %1989 = vmatpush1.bf16.msra.mxu0 0
        %1990 = vmatprep.subr.bf16.mxu0 0
        %1991 = vmatpush1.bf16.msra.mxu0 0
        %1992 = vmatprep.subr.bf16.mxu0 0
        %1993 = vmatpush1.bf16.msra.mxu0 0
        %1994 = vmatprep.subr.bf16.mxu0 0
        %1995 = vmatpush1.bf16.msra.mxu0 0
        %1996 = vmatprep.subr.bf16.mxu0 0
        %1997 = vmatpush1.bf16.msra.mxu0 0
        %1998 = vmatprep.subr.bf16.mxu0 0
        %1999 = vmatpush1.bf16.msra.mxu0 0
        %2000 = vmatprep.subr.bf16.mxu0 0
        %2001 = vmatpush1.bf16.msra.mxu0 0
        %2002 = vmatprep.subr.bf16.mxu0 0
        %2003 = vmatpush1.bf16.msra.mxu0 0
        %2004 = vmatprep.mubr.bf16.mxu0 0
        %2005 = vmatmul.mubr.bf16.gmra.mrb[0].mxu0 %v1970
        %v2006 = vpop.f32.mrb[0].mxu0
        %v2007 = vadd.f32 %v1955, %v2006
        %v2008 = vpop.f32.mrb[0].mxu0
        %v2009 = vpop.f32.mrb[0].mxu0
        %v2010 = vpop.f32.mrb[0].mxu0
        %2011 = vdwg.mxu0
        %v2012 = vmul.f32 %v2007, 0.5
        %v2013 = vmul.f32 %v2007, 0.70710677
        %v2014 = verf.f32.pop %v2013
        %v2015 = vadd.f32 %v2014, 1.0
        %v2016 = vmul.f32 %v2012, %v2015
        %v2017 = vpack.c.bf16 %v2016, %v2016
        %v2018 = vld [vmem:[%s13] sm:$0xf]
        %v2019 = vld [vmem:[%s13 + $0x4] sm:$0xf]
        %v2020 = vld [vmem:[%s13 + $0x8] sm:$0xf]
        %v2021 = vld [vmem:[%s13 + $0xc] sm:$0xf]
        %v2022 = vld [vmem:[%s13 + $0x10] sm:$0xf]
        %v2023 = vld [vmem:[%s13 + $0x14] sm:$0xf]
        %v2024 = vld [vmem:[%s13 + $0x18] sm:$0xf]
        %v2025 = vld [vmem:[%s13 + $0x1c] sm:$0xf]
        %v2026 = vld [vmem:[%s14] sm:$0x1]
        %v2028 = vlaneseq
        %v2029 = vshrl.u32 %v2028, 7
        %v2030 = vsub.s32 0, %v2029
        %v2031 = vrot.slane %v2026, %v2030
        %v2041 = vunpack.c.l.b16 %v2018
        %v2042 = vunpack.c.l.b16 %v2019
        %v2043 = vunpack.c.l.b16 %v2020
        %v2044 = vunpack.c.l.b16 %v2021
        %v2045 = vunpack.c.l.b16 %v2022
        %v2046 = vunpack.c.l.b16 %v2023
        %v2047 = vunpack.c.l.b16 %v2024
        %v2048 = vunpack.c.l.b16 %v2025
        %v2049 = vpack.c.b16 %v2042, %v2041
        %v2050 = vpack.c.b16 %v2044, %v2043
        %v2051 = vpack.c.b16 %v2046, %v2045
        %v2052 = vpack.c.b16 %v2048, %v2047
        %vm2057 = vcmask 523264
        %v2059 = vsel %vm2057, %v2017, 0
        %2061 = vmatprep.subr.bf16.mxu0 0
        %2062 = vmatpush1.bf16.msra.mxu0 %v2049
        %2063 = vmatprep.subr.bf16.mxu0 0
        %2064 = vmatpush1.bf16.msra.mxu0 %v2050
        %2065 = vmatprep.subr.bf16.mxu0 0
        %2066 = vmatpush1.bf16.msra.mxu0 %v2051
        %2067 = vmatprep.subr.bf16.mxu0 0
        %2068 = vmatpush1.bf16.msra.mxu0 %v2052
        %2069 = vmatprep.subr.bf16.mxu0 0
        %2070 = vmatpush1.bf16.msra.mxu0 0
        %2071 = vmatprep.subr.bf16.mxu0 0
        %2072 = vmatpush1.bf16.msra.mxu0 0
        %2073 = vmatprep.subr.bf16.mxu0 0
        %2074 = vmatpush1.bf16.msra.mxu0 0
        %2075 = vmatprep.subr.bf16.mxu0 0
        %2076 = vmatpush1.bf16.msra.mxu0 0
        %2077 = vmatprep.subr.bf16.mxu0 0
        %2078 = vmatpush1.bf16.msra.mxu0 0
        %2079 = vmatprep.subr.bf16.mxu0 0
        %2080 = vmatpush1.bf16.msra.mxu0 0
        %2081 = vmatprep.subr.bf16.mxu0 0
        %2082 = vmatpush1.bf16.msra.mxu0 0
        %2083 = vmatprep.subr.bf16.mxu0 0
        %2084 = vmatpush1.bf16.msra.mxu0 0
        %2085 = vmatprep.subr.bf16.mxu0 0
        %2086 = vmatpush1.bf16.msra.mxu0 0
        %2087 = vmatprep.subr.bf16.mxu0 0
        %2088 = vmatpush1.bf16.msra.mxu0 0
        %2089 = vmatprep.subr.bf16.mxu0 0
        %2090 = vmatpush1.bf16.msra.mxu0 0
        %2091 = vmatprep.subr.bf16.mxu0 0
        %2092 = vmatpush1.bf16.msra.mxu0 0
        %2093 = vmatprep.mubr.bf16.mxu0 0
        %2094 = vmatmul.mubr.bf16.gmra.mrb[0].mxu0 %v2059
        %v2095 = vpop.f32.mrb[0].mxu0
        %v2096 = vadd.f32 %v2031, %v2095
        %v2097 = vpop.f32.mrb[0].mxu0
        %v2098 = vpop.f32.mrb[0].mxu0
        %v2099 = vpop.f32.mrb[0].mxu0
        %2100 = vdwg.mxu0
        %v2101 = vadd.f32 %v2096, %v1915
        %2102 = vst.msk [vmem:[%s531] sm:$0xff] %vm549, %v2101
        %s2103 = sand.u32 %s383, 1
        %s2104 = scalar_lea.sflag [#allocation3], %s2103
        %s2105 = sand.u32 %s383, 1
        %s2106 = smul.addr %s2105, 8
        %s2107 = scalar_lea.vmem [#allocation2], %s2106
        // Predicated region
        $region81: #{tpu_custom_call.1} parent=79 // pred_check
          %p2108 = pneg %p393
        $region82: #{tpu_custom_call.1} parent=79 // pred_check_branch
          %2110 = sbr.rel (%p2108) target = $region84
        $region83: #{tpu_custom_call.1} parent=79 // pred_region
          %s2112 = ssub.s32 128, 128
          %2113 = vsyncadd %s2104, %s2112
          %s2114 = sadd.s32 %s34, %s33
          %s2115 = smul.addr %s2114, 128
          %s2116 = scalar_lea.hbm %s15, %s2115
          %s2118 = sshll.u32 %s2107, 4
          %s2119 = int_to_ptr.vmem [resolvable:$true] %s2118
          %2121 = dma.vmem_to_hbm [thread:$0]  %s2119, 128, %s2116, %s2104
        $region84: #{tpu_custom_call.1} parent=79 // pred_fallthru
          _
      $region80: #{tpu_custom_call.1} parent=5 // pred_fallthru
        _
      %p2122 = scmp.le.s32.totalorder 2, %s24
      // Predicated region
      $region85: #{tpu_custom_call.1} parent=5 // pred_check
        %p2123 = pneg %p2122
      $region86: #{tpu_custom_call.1} parent=5 // pred_check_branch
        %2125 = sbr.rel (%p2123) target = $region88
      $region87: #{tpu_custom_call.1} parent=5 // pred_region
        %s2126 = ssub.s32 %s24, 2
        // Predicated region
        $region89: #{tpu_custom_call.1} parent=87 // pred_check
          %p2127 = pneg %p399
        $region90: #{tpu_custom_call.1} parent=87 // pred_check_branch
          %2129 = sbr.rel (%p2127) target = $region92
        $region91: #{tpu_custom_call.1} parent=87 // pred_region
          %s2130 = sand.u32 %s384, 1
          %s2131 = scalar_lea.sflag [#allocation3], %s2130
          %s2132 = sand.u32 %s384, 1
          %s2133 = smul.addr %s2132, 8
          %s2134 = scalar_lea.vmem [#allocation2], %s2133
          %2135 = dma.done %s2131, 128
        $region92: #{tpu_custom_call.1} parent=87 // pred_fallthru
          _
      $region88: #{tpu_custom_call.1} parent=5 // pred_fallthru
        _
    $region6: #{tpu_custom_call.1} parent=1 // loop_footer
      %s28 = sadd.s32 1, %s24
    $region7: #{tpu_custom_call.1} parent=1 // loop_footer_branch
      %23 = sbr.rel target = $region3
    $region8: #{tpu_custom_call.1} parent=1 // loop_exit
      _
    %2136 = vsyncpa [#allocation3], 1
    %s2137 = scalar_lea.sflag [#allocation3], 1
    %2138 = vsyncpa %s2137, 1

</llo_original>
